<compile_context>
chip_gen: v5e
topology: v5e:2x2
jax: 0.10.0
libtpu: 0.0.40
codegen_flags: <defaults>
</compile_context>

<pallas_src>
import math

import jax
import jax.numpy as jnp
from jax.experimental import pallas as pl
from jax.experimental.pallas import tpu as pltpu  # noqa: F401  (TPU backend)

# ---------------- toy "bert-base"-structured config (small sizes) ----------------
VOCAB = 100
HIDDEN = 32
NUM_LAYERS = 2
NUM_HEADS = 4
HEAD_DIM = HIDDEN // NUM_HEADS
INTERMEDIATE = 64
MAX_POS = 16
TYPE_VOCAB = 2
LN_EPS = 1e-12


# ================================ fused Pallas kernel ================================
def _encoder_kernel(x_ref, mask_ref, hsel_ref,
                    emb_g_ref, emb_b_ref,
                    wq_ref, bq_ref, wk_ref, bk_ref, wv_ref, bv_ref,
                    wo_ref, bo_ref, ln1g_ref, ln1b_ref,
                    wi_ref, bi_ref, wf_ref, bf_ref, ln2g_ref, ln2b_ref,
                    clsw_ref, clsb_ref,
                    out_ref):
    f32 = jnp.float32

    def layernorm(y, g, b):
        mu = jnp.mean(y, axis=-1, keepdims=True)
        var = jnp.mean(jnp.square(y - mu), axis=-1, keepdims=True)
        return (y - mu) * jax.lax.rsqrt(var + LN_EPS) * g + b

    def gelu(y):
        # TODO(synk): HF BERT default is the exact erf-GELU; the tanh approximation
        # is used for guaranteed Mosaic elementwise lowering (numerically ~equal).
        return 0.5 * y * (1.0 + jnp.tanh(0.7978845608028654 * (y + 0.044715 * y * y * y)))

    # Loads that are reused by every layer/head are hoisted out of the loops.
    mask = mask_ref[...]          # (T, T) additive attention mask
    hsel = hsel_ref[...]          # (NUM_HEADS, 1, H) 0/1 per-head column selectors

    # Embedding LayerNorm (no zero residual tensor).
    x = layernorm(x_ref[...], emb_g_ref[...], emb_b_ref[...])          # (T, H)

    for l in range(NUM_LAYERS):       # static unroll; weights indexed on leading axis
        # ---- self-attention (softmax scale already folded into wq/bq) ----
        # Three column-aligned (H, H) projections are kept separate (rather than one
        # (H, 3H) matmul) so per-head extraction below needs no sub-128-lane slices;
        # inside this single kernel the three dots issue back-to-back from VMEM with
        # no extra launches or HBM traffic.
        q = jnp.dot(x, wq_ref[l], preferred_element_type=f32) + bq_ref[l]
        k = jnp.dot(x, wk_ref[l], preferred_element_type=f32) + bk_ref[l]
        v = jnp.dot(x, wv_ref[l], preferred_element_type=f32) + bv_ref[l]

        ctx = jnp.zeros_like(x)                                         # merged heads (T, H)
        for h in range(NUM_HEADS):
            sel = hsel[h]              # (1, H) 0/1 mask over this head's feature columns
            # (q*sel) @ k^T contracts only this head's columns -> exact per-head scores.
            s = jax.lax.dot_general(q * sel, k, (((1,), (1,)), ((), ())),
                                    preferred_element_type=f32)         # (T, T)
            s = s + mask
            s = s - jnp.max(s, axis=-1, keepdims=True)
            p = jnp.exp(s)
            p = p * pl.reciprocal(jnp.sum(p, axis=-1, keepdims=True), approx=True)
            # p @ (v*sel) drops this head's context into its own (disjoint) columns
            # of (T, H), so accumulating into ctx reconstructs merged heads exactly.
            ctx = ctx + jnp.dot(p, v * sel, preferred_element_type=f32)

        attn = jnp.dot(ctx, wo_ref[l], preferred_element_type=f32) + bo_ref[l]
        x = layernorm(attn + x, ln1g_ref[l], ln1b_ref[l])

        # ---- feed-forward: GELU(x @ Wi + bi) @ Wf + bf, residual + LN ----
        hmid = gelu(jnp.dot(x, wi_ref[l], preferred_element_type=f32) + bi_ref[l])
        ffn = jnp.dot(hmid, wf_ref[l], preferred_element_type=f32) + bf_ref[l]
        x = layernorm(ffn + x, ln2g_ref[l], ln2b_ref[l])

    # ---- per-token classifier head (hidden -> 1) as a lane-reduction epilogue ----
    out_ref[...] = jnp.sum(x * clsw_ref[...], axis=-1, keepdims=True) + clsb_ref[...]


# ================================ parameters ================================
def _normal(key, shape, std=0.02):
    return std * jax.random.normal(key, shape, dtype=jnp.float32)


def init_params(key):
    n_keys = 4 + NUM_LAYERS * 6
    keys = iter(jax.random.split(key, n_keys))
    zeros = lambda n: jnp.zeros((n,), jnp.float32)
    ones = lambda n: jnp.ones((n,), jnp.float32)
    params = {
        "word_emb": _normal(next(keys), (VOCAB, HIDDEN)),
        "pos_emb": _normal(next(keys), (MAX_POS, HIDDEN)),
        "type_emb": _normal(next(keys), (TYPE_VOCAB, HIDDEN)),
        "emb_ln_g": ones(HIDDEN), "emb_ln_b": zeros(HIDDEN),
        "cls_w": _normal(next(keys), (HIDDEN, 1)),
        "cls_b": zeros(1),
        "layers": [],
    }
    for _ in range(NUM_LAYERS):
        params["layers"].append({
            "wq": _normal(next(keys), (HIDDEN, HIDDEN)), "bq": zeros(HIDDEN),
            "wk": _normal(next(keys), (HIDDEN, HIDDEN)), "bk": zeros(HIDDEN),
            "wv": _normal(next(keys), (HIDDEN, HIDDEN)), "bv": zeros(HIDDEN),
            "wo": _normal(next(keys), (HIDDEN, HIDDEN)), "bo": zeros(HIDDEN),
            "ln1_g": ones(HIDDEN), "ln1_b": zeros(HIDDEN),
            "wi": _normal(next(keys), (HIDDEN, INTERMEDIATE)), "bi": zeros(INTERMEDIATE),
            "wf": _normal(next(keys), (INTERMEDIATE, HIDDEN)), "bf": zeros(HIDDEN),
            "ln2_g": ones(HIDDEN), "ln2_b": zeros(HIDDEN),
        })
    return params


def _pack_params(params):
    """Stack per-layer weights on a leading layer axis (kernel-friendly layout)."""
    L = len(params["layers"])
    scale = 1.0 / math.sqrt(HEAD_DIM)
    stack = lambda name: jnp.stack([lp[name] for lp in params["layers"]])
    row = lambda name: stack(name).reshape(L, 1, -1)
    packed = {
        "emb_g": params["emb_ln_g"].reshape(1, HIDDEN),
        "emb_b": params["emb_ln_b"].reshape(1, HIDDEN),
        # softmax 1/sqrt(head_dim) folded into the Q projection (zero runtime cost)
        "wq": stack("wq") * scale, "bq": row("bq") * scale,
        "wk": stack("wk"), "bk": row("bk"),
        "wv": stack("wv"), "bv": row("bv"),
        "wo": stack("wo"), "bo": row("bo"),
        "ln1_g": row("ln1_g"), "ln1_b": row("ln1_b"),
        "wi": stack("wi"), "bi": row("bi"),
        "wf": stack("wf"), "bf": row("bf"),
        "ln2_g": row("ln2_g"), "ln2_b": row("ln2_b"),
        "cls_w": params["cls_w"].reshape(1, HIDDEN),
        "cls_b": params["cls_b"].reshape(1, 1),
    }
    # Per-head 0/1 column-selection masks (NUM_HEADS, 1, HIDDEN), built host-side
    # once so the kernel never has to synthesize them with per-head VPU compares.
    col = jnp.arange(HIDDEN)
    packed["head_sel"] = jnp.stack(
        [((col >= h * HEAD_DIM) & (col < (h + 1) * HEAD_DIM)).astype(jnp.float32)
         for h in range(NUM_HEADS)]).reshape(NUM_HEADS, 1, HIDDEN)
    return packed


# ================================ forward pass ================================
def rhythmic_forward(params, input_ids, attention_mask=None):
    B, S = input_ids.shape
    T = B * S
    if attention_mask is None:
        attention_mask = jnp.ones((B, S), jnp.int32)

    # --- embeddings (table gathers stay in JAX glue; LN runs inside the kernel) ---
    x = (params["word_emb"][input_ids]
         + params["pos_emb"][jnp.arange(S)][None, :, :]
         + params["type_emb"][0][None, None, :])          # token_type_ids == 0
    x = x.reshape(T, HIDDEN).astype(jnp.float32)

    # --- single (T, T) additive mask shared by every layer and head ---
    # HF key-padding term (1 - mask) * -10000 plus a block-diagonal term so the B
    # independent sequences, flattened into one (T, T) score matrix, never attend
    # across batch (exp(-1e9 - max) == 0 exactly, so numerics match per-batch softmax).
    key_add = ((1.0 - attention_mask.astype(jnp.float32)) * -10000.0).reshape(T)
    batch_id = jnp.repeat(jnp.arange(B), S)
    block = jnp.where(batch_id[:, None] == batch_id[None, :], 0.0, -1e9)
    mask = (block + key_add[None, :]).astype(jnp.float32)   # (T, T)

    p = _pack_params(params)

    # One pallas_call for the whole post-embedding network; every operand is a
    # whole-array VMEM block (total footprint « VMEM), so nothing round-trips HBM
    # between layers.
    logits = pl.pallas_call(
        _encoder_kernel,
        out_shape=jax.ShapeDtypeStruct((T, 1), jnp.float32),
    )(x, mask, p["head_sel"], p["emb_g"], p["emb_b"],
      p["wq"], p["bq"], p["wk"], p["bk"], p["wv"], p["bv"],
      p["wo"], p["bo"], p["ln1_g"], p["ln1_b"],
      p["wi"], p["bi"], p["wf"], p["bf"], p["ln2_g"], p["ln2_b"],
      p["cls_w"], p["cls_b"])

    return logits.reshape(B, S, 1)


# ================================ main ================================
if __name__ == "__main__":
    key = jax.random.PRNGKey(0)
    pkey, ikey = jax.random.split(key)
    params = init_params(pkey)

    B, S = 2, 8
    input_ids = jax.random.randint(ikey, (B, S), 0, VOCAB, dtype=jnp.int32)
    attention_mask = jnp.ones((B, S), dtype=jnp.int32)

    logits = jax.jit(rhythmic_forward)(params, input_ids, attention_mask)
    logits = jax.block_until_ready(logits)
    assert logits.shape == (B, S, 1) and logits.dtype == jnp.float32
    print("KERNEL_OK")
</pallas_src>

<mosaic_0001>
module attributes {stable_mosaic.version = 11 : i64} {
  func.func @_encoder_kernel(%arg0: memref<16x32xf32, #tpu.memory_space<vmem>>, %arg1: memref<16x16xf32, #tpu.memory_space<vmem>>, %arg2: memref<4x1x32xf32, #tpu.memory_space<vmem>>, %arg3: memref<1x32xf32, #tpu.memory_space<vmem>>, %arg4: memref<1x32xf32, #tpu.memory_space<vmem>>, %arg5: memref<2x32x32xf32, #tpu.memory_space<vmem>>, %arg6: memref<2x1x32xf32, #tpu.memory_space<vmem>>, %arg7: memref<2x32x32xf32, #tpu.memory_space<vmem>>, %arg8: memref<2x1x32xf32, #tpu.memory_space<vmem>>, %arg9: memref<2x32x32xf32, #tpu.memory_space<vmem>>, %arg10: memref<2x1x32xf32, #tpu.memory_space<vmem>>, %arg11: memref<2x32x32xf32, #tpu.memory_space<vmem>>, %arg12: memref<2x1x32xf32, #tpu.memory_space<vmem>>, %arg13: memref<2x1x32xf32, #tpu.memory_space<vmem>>, %arg14: memref<2x1x32xf32, #tpu.memory_space<vmem>>, %arg15: memref<2x32x64xf32, #tpu.memory_space<vmem>>, %arg16: memref<2x1x64xf32, #tpu.memory_space<vmem>>, %arg17: memref<2x64x32xf32, #tpu.memory_space<vmem>>, %arg18: memref<2x1x32xf32, #tpu.memory_space<vmem>>, %arg19: memref<2x1x32xf32, #tpu.memory_space<vmem>>, %arg20: memref<2x1x32xf32, #tpu.memory_space<vmem>>, %arg21: memref<1x32xf32, #tpu.memory_space<vmem>>, %arg22: memref<1x1xf32, #tpu.memory_space<vmem>>, %arg23: memref<16x1xf32, #tpu.memory_space<vmem>>) attributes {dimension_semantics = [], scalar_prefetch = 0 : i64, scratch_operands = 0 : i64, tpu.core_type = #tpu.core_type<tc>} {
    %c0 = arith.constant 0 : index
    %c0_0 = arith.constant 0 : index
    %0 = vector.load %arg1[%c0, %c0_0] : memref<16x16xf32, #tpu.memory_space<vmem>>, vector<16x16xf32>
    %c0_1 = arith.constant 0 : index
    %c0_2 = arith.constant 0 : index
    %c0_3 = arith.constant 0 : index
    %1 = vector.load %arg2[%c0_1, %c0_2, %c0_3] : memref<4x1x32xf32, #tpu.memory_space<vmem>>, vector<4x1x32xf32>
    %c0_4 = arith.constant 0 : index
    %c0_5 = arith.constant 0 : index
    %2 = vector.load %arg0[%c0_4, %c0_5] : memref<16x32xf32, #tpu.memory_space<vmem>>, vector<16x32xf32>
    %c0_6 = arith.constant 0 : index
    %c0_7 = arith.constant 0 : index
    %3 = vector.load %arg3[%c0_6, %c0_7] : memref<1x32xf32, #tpu.memory_space<vmem>>, vector<1x32xf32>
    %c0_8 = arith.constant 0 : index
    %c0_9 = arith.constant 0 : index
    %4 = vector.load %arg4[%c0_8, %c0_9] : memref<1x32xf32, #tpu.memory_space<vmem>>, vector<1x32xf32>
    %cst = arith.constant dense<0.000000e+00> : vector<16xf32>
    %5 = vector.multi_reduction <add>, %2, %cst [1] : vector<16x32xf32> to vector<16xf32>
    %6 = vector.shape_cast %5 : vector<16xf32> to vector<16x1xf32>
    %cst_10 = arith.constant 3.200000e+01 : f32
    %7 = vector.broadcast %cst_10 : f32 to vector<16x1xf32>
    %8 = arith.divf %6, %7 : vector<16x1xf32>
    %9 = vector.broadcast %8 : vector<16x1xf32> to vector<16x32xf32>
    %10 = arith.subf %2, %9 : vector<16x32xf32>
    %11 = arith.mulf %10, %10 : vector<16x32xf32>
    %cst_11 = arith.constant dense<0.000000e+00> : vector<16xf32>
    %12 = vector.multi_reduction <add>, %11, %cst_11 [1] : vector<16x32xf32> to vector<16xf32>
    %13 = vector.shape_cast %12 : vector<16xf32> to vector<16x1xf32>
    %cst_12 = arith.constant 3.200000e+01 : f32
    %14 = vector.broadcast %cst_12 : f32 to vector<16x1xf32>
    %15 = arith.divf %13, %14 : vector<16x1xf32>
    %16 = vector.broadcast %8 : vector<16x1xf32> to vector<16x32xf32>
    %17 = arith.subf %2, %16 : vector<16x32xf32>
    %cst_13 = arith.constant 9.99999996E-13 : f32
    %18 = vector.broadcast %cst_13 : f32 to vector<16x1xf32>
    %19 = arith.addf %15, %18 : vector<16x1xf32>
    %20 = math.rsqrt %19 : vector<16x1xf32>
    %21 = vector.broadcast %20 : vector<16x1xf32> to vector<16x32xf32>
    %22 = arith.mulf %17, %21 : vector<16x32xf32>
    %23 = vector.broadcast %3 : vector<1x32xf32> to vector<16x32xf32>
    %24 = arith.mulf %22, %23 : vector<16x32xf32>
    %25 = vector.broadcast %4 : vector<1x32xf32> to vector<16x32xf32>
    %26 = arith.addf %24, %25 : vector<16x32xf32>
    %c0_14 = arith.constant 0 : index
    %c0_15 = arith.constant 0 : index
    %c0_16 = arith.constant 0 : index
    %27 = vector.load %arg5[%c0_14, %c0_15, %c0_16] : memref<2x32x32xf32, #tpu.memory_space<vmem>>, vector<1x32x32xf32>
    %28 = vector.shape_cast %27 : vector<1x32x32xf32> to vector<32x32xf32>
    %cst_17 = arith.constant dense<0.000000e+00> : vector<16x32xf32>
    %29 = tpu.matmul %26, %28, %cst_17 {dimension_numbers = #tpu.dot_dimension_numbers<[1], [0], [0], [1], [0, 0, 1, 1], [], []>} : vector<16x32xf32>, vector<32x32xf32>, vector<16x32xf32> -> vector<16x32xf32>
    %c0_18 = arith.constant 0 : index
    %c0_19 = arith.constant 0 : index
    %c0_20 = arith.constant 0 : index
    %30 = vector.load %arg6[%c0_18, %c0_19, %c0_20] : memref<2x1x32xf32, #tpu.memory_space<vmem>>, vector<1x1x32xf32>
    %31 = vector.shape_cast %30 : vector<1x1x32xf32> to vector<1x32xf32>
    %32 = vector.broadcast %31 : vector<1x32xf32> to vector<16x32xf32>
    %33 = arith.addf %29, %32 : vector<16x32xf32>
    %c0_21 = arith.constant 0 : index
    %c0_22 = arith.constant 0 : index
    %c0_23 = arith.constant 0 : index
    %34 = vector.load %arg7[%c0_21, %c0_22, %c0_23] : memref<2x32x32xf32, #tpu.memory_space<vmem>>, vector<1x32x32xf32>
    %35 = vector.shape_cast %34 : vector<1x32x32xf32> to vector<32x32xf32>
    %cst_24 = arith.constant dense<0.000000e+00> : vector<16x32xf32>
    %36 = tpu.matmul %26, %35, %cst_24 {dimension_numbers = #tpu.dot_dimension_numbers<[1], [0], [0], [1], [0, 0, 1, 1], [], []>} : vector<16x32xf32>, vector<32x32xf32>, vector<16x32xf32> -> vector<16x32xf32>
    %c0_25 = arith.constant 0 : index
    %c0_26 = arith.constant 0 : index
    %c0_27 = arith.constant 0 : index
    %37 = vector.load %arg8[%c0_25, %c0_26, %c0_27] : memref<2x1x32xf32, #tpu.memory_space<vmem>>, vector<1x1x32xf32>
    %38 = vector.shape_cast %37 : vector<1x1x32xf32> to vector<1x32xf32>
    %39 = vector.broadcast %38 : vector<1x32xf32> to vector<16x32xf32>
    %40 = arith.addf %36, %39 : vector<16x32xf32>
    %c0_28 = arith.constant 0 : index
    %c0_29 = arith.constant 0 : index
    %c0_30 = arith.constant 0 : index
    %41 = vector.load %arg9[%c0_28, %c0_29, %c0_30] : memref<2x32x32xf32, #tpu.memory_space<vmem>>, vector<1x32x32xf32>
    %42 = vector.shape_cast %41 : vector<1x32x32xf32> to vector<32x32xf32>
    %cst_31 = arith.constant dense<0.000000e+00> : vector<16x32xf32>
    %43 = tpu.matmul %26, %42, %cst_31 {dimension_numbers = #tpu.dot_dimension_numbers<[1], [0], [0], [1], [0, 0, 1, 1], [], []>} : vector<16x32xf32>, vector<32x32xf32>, vector<16x32xf32> -> vector<16x32xf32>
    %c0_32 = arith.constant 0 : index
    %c0_33 = arith.constant 0 : index
    %c0_34 = arith.constant 0 : index
    %44 = vector.load %arg10[%c0_32, %c0_33, %c0_34] : memref<2x1x32xf32, #tpu.memory_space<vmem>>, vector<1x1x32xf32>
    %45 = vector.shape_cast %44 : vector<1x1x32xf32> to vector<1x32xf32>
    %46 = vector.broadcast %45 : vector<1x32xf32> to vector<16x32xf32>
    %47 = arith.addf %43, %46 : vector<16x32xf32>
    %cst_35 = arith.constant 0.000000e+00 : f32
    %48 = vector.broadcast %cst_35 : f32 to vector<16x32xf32>
    %49 = vector.extract_strided_slice %1 {offsets = [0, 0, 0], sizes = [1, 1, 32], strides = [1, 1, 1]} : vector<4x1x32xf32> to vector<1x1x32xf32>
    %50 = vector.shape_cast %49 : vector<1x1x32xf32> to vector<1x32xf32>
    %51 = vector.broadcast %50 : vector<1x32xf32> to vector<16x32xf32>
    %52 = arith.mulf %33, %51 : vector<16x32xf32>
    %cst_36 = arith.constant dense<0.000000e+00> : vector<16x16xf32>
    %53 = tpu.matmul %52, %40, %cst_36 {dimension_numbers = #tpu.dot_dimension_numbers<[1], [1], [0], [0], [0, 0, 1, 0], [], []>} : vector<16x32xf32>, vector<16x32xf32>, vector<16x16xf32> -> vector<16x16xf32>
    %54 = arith.addf %53, %0 : vector<16x16xf32>
    %cst_37 = arith.constant dense<0xFF800000> : vector<16xf32>
    %55 = vector.multi_reduction <maximumf>, %54, %cst_37 [1] : vector<16x16xf32> to vector<16xf32>
    %56 = vector.shape_cast %55 : vector<16xf32> to vector<16x1xf32>
    %57 = vector.broadcast %56 : vector<16x1xf32> to vector<16x16xf32>
    %58 = arith.subf %54, %57 : vector<16x16xf32>
    %59 = math.exp %58 : vector<16x16xf32>
    %cst_38 = arith.constant dense<0.000000e+00> : vector<16xf32>
    %60 = vector.multi_reduction <add>, %59, %cst_38 [1] : vector<16x16xf32> to vector<16xf32>
    %61 = vector.shape_cast %60 : vector<16xf32> to vector<16x1xf32>
    %62 = tpu.reciprocal %61 {approx = true} : vector<16x1xf32> -> vector<16x1xf32>
    %63 = vector.broadcast %62 : vector<16x1xf32> to vector<16x16xf32>
    %64 = arith.mulf %59, %63 : vector<16x16xf32>
    %65 = vector.broadcast %50 : vector<1x32xf32> to vector<16x32xf32>
    %66 = arith.mulf %47, %65 : vector<16x32xf32>
    %cst_39 = arith.constant dense<0.000000e+00> : vector<16x32xf32>
    %67 = tpu.matmul %64, %66, %cst_39 {dimension_numbers = #tpu.dot_dimension_numbers<[1], [0], [0], [1], [0, 0, 1, 1], [], []>} : vector<16x16xf32>, vector<16x32xf32>, vector<16x32xf32> -> vector<16x32xf32>
    %68 = arith.addf %48, %67 : vector<16x32xf32>
    %69 = vector.extract_strided_slice %1 {offsets = [1, 0, 0], sizes = [1, 1, 32], strides = [1, 1, 1]} : vector<4x1x32xf32> to vector<1x1x32xf32>
    %70 = vector.shape_cast %69 : vector<1x1x32xf32> to vector<1x32xf32>
    %71 = vector.broadcast %70 : vector<1x32xf32> to vector<16x32xf32>
    %72 = arith.mulf %33, %71 : vector<16x32xf32>
    %cst_40 = arith.constant dense<0.000000e+00> : vector<16x16xf32>
    %73 = tpu.matmul %72, %40, %cst_40 {dimension_numbers = #tpu.dot_dimension_numbers<[1], [1], [0], [0], [0, 0, 1, 0], [], []>} : vector<16x32xf32>, vector<16x32xf32>, vector<16x16xf32> -> vector<16x16xf32>
    %74 = arith.addf %73, %0 : vector<16x16xf32>
    %cst_41 = arith.constant dense<0xFF800000> : vector<16xf32>
    %75 = vector.multi_reduction <maximumf>, %74, %cst_41 [1] : vector<16x16xf32> to vector<16xf32>
    %76 = vector.shape_cast %75 : vector<16xf32> to vector<16x1xf32>
    %77 = vector.broadcast %76 : vector<16x1xf32> to vector<16x16xf32>
    %78 = arith.subf %74, %77 : vector<16x16xf32>
    %79 = math.exp %78 : vector<16x16xf32>
    %cst_42 = arith.constant dense<0.000000e+00> : vector<16xf32>
    %80 = vector.multi_reduction <add>, %79, %cst_42 [1] : vector<16x16xf32> to vector<16xf32>
    %81 = vector.shape_cast %80 : vector<16xf32> to vector<16x1xf32>
    %82 = tpu.reciprocal %81 {approx = true} : vector<16x1xf32> -> vector<16x1xf32>
    %83 = vector.broadcast %82 : vector<16x1xf32> to vector<16x16xf32>
    %84 = arith.mulf %79, %83 : vector<16x16xf32>
    %85 = vector.broadcast %70 : vector<1x32xf32> to vector<16x32xf32>
    %86 = arith.mulf %47, %85 : vector<16x32xf32>
    %cst_43 = arith.constant dense<0.000000e+00> : vector<16x32xf32>
    %87 = tpu.matmul %84, %86, %cst_43 {dimension_numbers = #tpu.dot_dimension_numbers<[1], [0], [0], [1], [0, 0, 1, 1], [], []>} : vector<16x16xf32>, vector<16x32xf32>, vector<16x32xf32> -> vector<16x32xf32>
    %88 = arith.addf %68, %87 : vector<16x32xf32>
    %89 = vector.extract_strided_slice %1 {offsets = [2, 0, 0], sizes = [1, 1, 32], strides = [1, 1, 1]} : vector<4x1x32xf32> to vector<1x1x32xf32>
    %90 = vector.shape_cast %89 : vector<1x1x32xf32> to vector<1x32xf32>
    %91 = vector.broadcast %90 : vector<1x32xf32> to vector<16x32xf32>
    %92 = arith.mulf %33, %91 : vector<16x32xf32>
    %cst_44 = arith.constant dense<0.000000e+00> : vector<16x16xf32>
    %93 = tpu.matmul %92, %40, %cst_44 {dimension_numbers = #tpu.dot_dimension_numbers<[1], [1], [0], [0], [0, 0, 1, 0], [], []>} : vector<16x32xf32>, vector<16x32xf32>, vector<16x16xf32> -> vector<16x16xf32>
    %94 = arith.addf %93, %0 : vector<16x16xf32>
    %cst_45 = arith.constant dense<0xFF800000> : vector<16xf32>
    %95 = vector.multi_reduction <maximumf>, %94, %cst_45 [1] : vector<16x16xf32> to vector<16xf32>
    %96 = vector.shape_cast %95 : vector<16xf32> to vector<16x1xf32>
    %97 = vector.broadcast %96 : vector<16x1xf32> to vector<16x16xf32>
    %98 = arith.subf %94, %97 : vector<16x16xf32>
    %99 = math.exp %98 : vector<16x16xf32>
    %cst_46 = arith.constant dense<0.000000e+00> : vector<16xf32>
    %100 = vector.multi_reduction <add>, %99, %cst_46 [1] : vector<16x16xf32> to vector<16xf32>
    %101 = vector.shape_cast %100 : vector<16xf32> to vector<16x1xf32>
    %102 = tpu.reciprocal %101 {approx = true} : vector<16x1xf32> -> vector<16x1xf32>
    %103 = vector.broadcast %102 : vector<16x1xf32> to vector<16x16xf32>
    %104 = arith.mulf %99, %103 : vector<16x16xf32>
    %105 = vector.broadcast %90 : vector<1x32xf32> to vector<16x32xf32>
    %106 = arith.mulf %47, %105 : vector<16x32xf32>
    %cst_47 = arith.constant dense<0.000000e+00> : vector<16x32xf32>
    %107 = tpu.matmul %104, %106, %cst_47 {dimension_numbers = #tpu.dot_dimension_numbers<[1], [0], [0], [1], [0, 0, 1, 1], [], []>} : vector<16x16xf32>, vector<16x32xf32>, vector<16x32xf32> -> vector<16x32xf32>
    %108 = arith.addf %88, %107 : vector<16x32xf32>
    %109 = vector.extract_strided_slice %1 {offsets = [3, 0, 0], sizes = [1, 1, 32], strides = [1, 1, 1]} : vector<4x1x32xf32> to vector<1x1x32xf32>
    %110 = vector.shape_cast %109 : vector<1x1x32xf32> to vector<1x32xf32>
    %111 = vector.broadcast %110 : vector<1x32xf32> to vector<16x32xf32>
    %112 = arith.mulf %33, %111 : vector<16x32xf32>
    %cst_48 = arith.constant dense<0.000000e+00> : vector<16x16xf32>
    %113 = tpu.matmul %112, %40, %cst_48 {dimension_numbers = #tpu.dot_dimension_numbers<[1], [1], [0], [0], [0, 0, 1, 0], [], []>} : vector<16x32xf32>, vector<16x32xf32>, vector<16x16xf32> -> vector<16x16xf32>
    %114 = arith.addf %113, %0 : vector<16x16xf32>
    %cst_49 = arith.constant dense<0xFF800000> : vector<16xf32>
    %115 = vector.multi_reduction <maximumf>, %114, %cst_49 [1] : vector<16x16xf32> to vector<16xf32>
    %116 = vector.shape_cast %115 : vector<16xf32> to vector<16x1xf32>
    %117 = vector.broadcast %116 : vector<16x1xf32> to vector<16x16xf32>
    %118 = arith.subf %114, %117 : vector<16x16xf32>
    %119 = math.exp %118 : vector<16x16xf32>
    %cst_50 = arith.constant dense<0.000000e+00> : vector<16xf32>
    %120 = vector.multi_reduction <add>, %119, %cst_50 [1] : vector<16x16xf32> to vector<16xf32>
    %121 = vector.shape_cast %120 : vector<16xf32> to vector<16x1xf32>
    %122 = tpu.reciprocal %121 {approx = true} : vector<16x1xf32> -> vector<16x1xf32>
    %123 = vector.broadcast %122 : vector<16x1xf32> to vector<16x16xf32>
    %124 = arith.mulf %119, %123 : vector<16x16xf32>
    %125 = vector.broadcast %110 : vector<1x32xf32> to vector<16x32xf32>
    %126 = arith.mulf %47, %125 : vector<16x32xf32>
    %cst_51 = arith.constant dense<0.000000e+00> : vector<16x32xf32>
    %127 = tpu.matmul %124, %126, %cst_51 {dimension_numbers = #tpu.dot_dimension_numbers<[1], [0], [0], [1], [0, 0, 1, 1], [], []>} : vector<16x16xf32>, vector<16x32xf32>, vector<16x32xf32> -> vector<16x32xf32>
    %128 = arith.addf %108, %127 : vector<16x32xf32>
    %c0_52 = arith.constant 0 : index
    %c0_53 = arith.constant 0 : index
    %c0_54 = arith.constant 0 : index
    %129 = vector.load %arg11[%c0_52, %c0_53, %c0_54] : memref<2x32x32xf32, #tpu.memory_space<vmem>>, vector<1x32x32xf32>
    %130 = vector.shape_cast %129 : vector<1x32x32xf32> to vector<32x32xf32>
    %cst_55 = arith.constant dense<0.000000e+00> : vector<16x32xf32>
    %131 = tpu.matmul %128, %130, %cst_55 {dimension_numbers = #tpu.dot_dimension_numbers<[1], [0], [0], [1], [0, 0, 1, 1], [], []>} : vector<16x32xf32>, vector<32x32xf32>, vector<16x32xf32> -> vector<16x32xf32>
    %c0_56 = arith.constant 0 : index
    %c0_57 = arith.constant 0 : index
    %c0_58 = arith.constant 0 : index
    %132 = vector.load %arg12[%c0_56, %c0_57, %c0_58] : memref<2x1x32xf32, #tpu.memory_space<vmem>>, vector<1x1x32xf32>
    %133 = vector.shape_cast %132 : vector<1x1x32xf32> to vector<1x32xf32>
    %134 = vector.broadcast %133 : vector<1x32xf32> to vector<16x32xf32>
    %135 = arith.addf %131, %134 : vector<16x32xf32>
    %136 = arith.addf %135, %26 : vector<16x32xf32>
    %c0_59 = arith.constant 0 : index
    %c0_60 = arith.constant 0 : index
    %c0_61 = arith.constant 0 : index
    %137 = vector.load %arg13[%c0_59, %c0_60, %c0_61] : memref<2x1x32xf32, #tpu.memory_space<vmem>>, vector<1x1x32xf32>
    %138 = vector.shape_cast %137 : vector<1x1x32xf32> to vector<1x32xf32>
    %c0_62 = arith.constant 0 : index
    %c0_63 = arith.constant 0 : index
    %c0_64 = arith.constant 0 : index
    %139 = vector.load %arg14[%c0_62, %c0_63, %c0_64] : memref<2x1x32xf32, #tpu.memory_space<vmem>>, vector<1x1x32xf32>
    %140 = vector.shape_cast %139 : vector<1x1x32xf32> to vector<1x32xf32>
    %cst_65 = arith.constant dense<0.000000e+00> : vector<16xf32>
    %141 = vector.multi_reduction <add>, %136, %cst_65 [1] : vector<16x32xf32> to vector<16xf32>
    %142 = vector.shape_cast %141 : vector<16xf32> to vector<16x1xf32>
    %cst_66 = arith.constant 3.200000e+01 : f32
    %143 = vector.broadcast %cst_66 : f32 to vector<16x1xf32>
    %144 = arith.divf %142, %143 : vector<16x1xf32>
    %145 = vector.broadcast %144 : vector<16x1xf32> to vector<16x32xf32>
    %146 = arith.subf %136, %145 : vector<16x32xf32>
    %147 = arith.mulf %146, %146 : vector<16x32xf32>
    %cst_67 = arith.constant dense<0.000000e+00> : vector<16xf32>
    %148 = vector.multi_reduction <add>, %147, %cst_67 [1] : vector<16x32xf32> to vector<16xf32>
    %149 = vector.shape_cast %148 : vector<16xf32> to vector<16x1xf32>
    %cst_68 = arith.constant 3.200000e+01 : f32
    %150 = vector.broadcast %cst_68 : f32 to vector<16x1xf32>
    %151 = arith.divf %149, %150 : vector<16x1xf32>
    %152 = vector.broadcast %144 : vector<16x1xf32> to vector<16x32xf32>
    %153 = arith.subf %136, %152 : vector<16x32xf32>
    %cst_69 = arith.constant 9.99999996E-13 : f32
    %154 = vector.broadcast %cst_69 : f32 to vector<16x1xf32>
    %155 = arith.addf %151, %154 : vector<16x1xf32>
    %156 = math.rsqrt %155 : vector<16x1xf32>
    %157 = vector.broadcast %156 : vector<16x1xf32> to vector<16x32xf32>
    %158 = arith.mulf %153, %157 : vector<16x32xf32>
    %159 = vector.broadcast %138 : vector<1x32xf32> to vector<16x32xf32>
    %160 = arith.mulf %158, %159 : vector<16x32xf32>
    %161 = vector.broadcast %140 : vector<1x32xf32> to vector<16x32xf32>
    %162 = arith.addf %160, %161 : vector<16x32xf32>
    %c0_70 = arith.constant 0 : index
    %c0_71 = arith.constant 0 : index
    %c0_72 = arith.constant 0 : index
    %163 = vector.load %arg15[%c0_70, %c0_71, %c0_72] : memref<2x32x64xf32, #tpu.memory_space<vmem>>, vector<1x32x64xf32>
    %164 = vector.shape_cast %163 : vector<1x32x64xf32> to vector<32x64xf32>
    %cst_73 = arith.constant dense<0.000000e+00> : vector<16x64xf32>
    %165 = tpu.matmul %162, %164, %cst_73 {dimension_numbers = #tpu.dot_dimension_numbers<[1], [0], [0], [1], [0, 0, 1, 1], [], []>} : vector<16x32xf32>, vector<32x64xf32>, vector<16x64xf32> -> vector<16x64xf32>
    %c0_74 = arith.constant 0 : index
    %c0_75 = arith.constant 0 : index
    %c0_76 = arith.constant 0 : index
    %166 = vector.load %arg16[%c0_74, %c0_75, %c0_76] : memref<2x1x64xf32, #tpu.memory_space<vmem>>, vector<1x1x64xf32>
    %167 = vector.shape_cast %166 : vector<1x1x64xf32> to vector<1x64xf32>
    %168 = vector.broadcast %167 : vector<1x64xf32> to vector<16x64xf32>
    %169 = arith.addf %165, %168 : vector<16x64xf32>
    %cst_77 = arith.constant 5.000000e-01 : f32
    %170 = vector.broadcast %cst_77 : f32 to vector<16x64xf32>
    %171 = arith.mulf %170, %169 : vector<16x64xf32>
    %cst_78 = arith.constant 4.471500e-02 : f32
    %172 = vector.broadcast %cst_78 : f32 to vector<16x64xf32>
    %173 = arith.mulf %172, %169 : vector<16x64xf32>
    %174 = arith.mulf %173, %169 : vector<16x64xf32>
    %175 = arith.mulf %174, %169 : vector<16x64xf32>
    %176 = arith.addf %169, %175 : vector<16x64xf32>
    %cst_79 = arith.constant 0.797884583 : f32
    %177 = vector.broadcast %cst_79 : f32 to vector<16x64xf32>
    %178 = arith.mulf %177, %176 : vector<16x64xf32>
    %179 = math.tanh %178 : vector<16x64xf32>
    %cst_80 = arith.constant 1.000000e+00 : f32
    %180 = vector.broadcast %cst_80 : f32 to vector<16x64xf32>
    %181 = arith.addf %180, %179 : vector<16x64xf32>
    %182 = arith.mulf %171, %181 : vector<16x64xf32>
    %c0_81 = arith.constant 0 : index
    %c0_82 = arith.constant 0 : index
    %c0_83 = arith.constant 0 : index
    %183 = vector.load %arg17[%c0_81, %c0_82, %c0_83] : memref<2x64x32xf32, #tpu.memory_space<vmem>>, vector<1x64x32xf32>
    %184 = vector.shape_cast %183 : vector<1x64x32xf32> to vector<64x32xf32>
    %cst_84 = arith.constant dense<0.000000e+00> : vector<16x32xf32>
    %185 = tpu.matmul %182, %184, %cst_84 {dimension_numbers = #tpu.dot_dimension_numbers<[1], [0], [0], [1], [0, 0, 1, 1], [], []>} : vector<16x64xf32>, vector<64x32xf32>, vector<16x32xf32> -> vector<16x32xf32>
    %c0_85 = arith.constant 0 : index
    %c0_86 = arith.constant 0 : index
    %c0_87 = arith.constant 0 : index
    %186 = vector.load %arg18[%c0_85, %c0_86, %c0_87] : memref<2x1x32xf32, #tpu.memory_space<vmem>>, vector<1x1x32xf32>
    %187 = vector.shape_cast %186 : vector<1x1x32xf32> to vector<1x32xf32>
    %188 = vector.broadcast %187 : vector<1x32xf32> to vector<16x32xf32>
    %189 = arith.addf %185, %188 : vector<16x32xf32>
    %190 = arith.addf %189, %162 : vector<16x32xf32>
    %c0_88 = arith.constant 0 : index
    %c0_89 = arith.constant 0 : index
    %c0_90 = arith.constant 0 : index
    %191 = vector.load %arg19[%c0_88, %c0_89, %c0_90] : memref<2x1x32xf32, #tpu.memory_space<vmem>>, vector<1x1x32xf32>
    %192 = vector.shape_cast %191 : vector<1x1x32xf32> to vector<1x32xf32>
    %c0_91 = arith.constant 0 : index
    %c0_92 = arith.constant 0 : index
    %c0_93 = arith.constant 0 : index
    %193 = vector.load %arg20[%c0_91, %c0_92, %c0_93] : memref<2x1x32xf32, #tpu.memory_space<vmem>>, vector<1x1x32xf32>
    %194 = vector.shape_cast %193 : vector<1x1x32xf32> to vector<1x32xf32>
    %cst_94 = arith.constant dense<0.000000e+00> : vector<16xf32>
    %195 = vector.multi_reduction <add>, %190, %cst_94 [1] : vector<16x32xf32> to vector<16xf32>
    %196 = vector.shape_cast %195 : vector<16xf32> to vector<16x1xf32>
    %cst_95 = arith.constant 3.200000e+01 : f32
    %197 = vector.broadcast %cst_95 : f32 to vector<16x1xf32>
    %198 = arith.divf %196, %197 : vector<16x1xf32>
    %199 = vector.broadcast %198 : vector<16x1xf32> to vector<16x32xf32>
    %200 = arith.subf %190, %199 : vector<16x32xf32>
    %201 = arith.mulf %200, %200 : vector<16x32xf32>
    %cst_96 = arith.constant dense<0.000000e+00> : vector<16xf32>
    %202 = vector.multi_reduction <add>, %201, %cst_96 [1] : vector<16x32xf32> to vector<16xf32>
    %203 = vector.shape_cast %202 : vector<16xf32> to vector<16x1xf32>
    %cst_97 = arith.constant 3.200000e+01 : f32
    %204 = vector.broadcast %cst_97 : f32 to vector<16x1xf32>
    %205 = arith.divf %203, %204 : vector<16x1xf32>
    %206 = vector.broadcast %198 : vector<16x1xf32> to vector<16x32xf32>
    %207 = arith.subf %190, %206 : vector<16x32xf32>
    %cst_98 = arith.constant 9.99999996E-13 : f32
    %208 = vector.broadcast %cst_98 : f32 to vector<16x1xf32>
    %209 = arith.addf %205, %208 : vector<16x1xf32>
    %210 = math.rsqrt %209 : vector<16x1xf32>
    %211 = vector.broadcast %210 : vector<16x1xf32> to vector<16x32xf32>
    %212 = arith.mulf %207, %211 : vector<16x32xf32>
    %213 = vector.broadcast %192 : vector<1x32xf32> to vector<16x32xf32>
    %214 = arith.mulf %212, %213 : vector<16x32xf32>
    %215 = vector.broadcast %194 : vector<1x32xf32> to vector<16x32xf32>
    %216 = arith.addf %214, %215 : vector<16x32xf32>
    %c1 = arith.constant 1 : index
    %c0_99 = arith.constant 0 : index
    %c0_100 = arith.constant 0 : index
    %217 = vector.load %arg5[%c1, %c0_99, %c0_100] : memref<2x32x32xf32, #tpu.memory_space<vmem>>, vector<1x32x32xf32>
    %218 = vector.shape_cast %217 : vector<1x32x32xf32> to vector<32x32xf32>
    %cst_101 = arith.constant dense<0.000000e+00> : vector<16x32xf32>
    %219 = tpu.matmul %216, %218, %cst_101 {dimension_numbers = #tpu.dot_dimension_numbers<[1], [0], [0], [1], [0, 0, 1, 1], [], []>} : vector<16x32xf32>, vector<32x32xf32>, vector<16x32xf32> -> vector<16x32xf32>
    %c1_102 = arith.constant 1 : index
    %c0_103 = arith.constant 0 : index
    %c0_104 = arith.constant 0 : index
    %220 = vector.load %arg6[%c1_102, %c0_103, %c0_104] : memref<2x1x32xf32, #tpu.memory_space<vmem>>, vector<1x1x32xf32>
    %221 = vector.shape_cast %220 : vector<1x1x32xf32> to vector<1x32xf32>
    %222 = vector.broadcast %221 : vector<1x32xf32> to vector<16x32xf32>
    %223 = arith.addf %219, %222 : vector<16x32xf32>
    %c1_105 = arith.constant 1 : index
    %c0_106 = arith.constant 0 : index
    %c0_107 = arith.constant 0 : index
    %224 = vector.load %arg7[%c1_105, %c0_106, %c0_107] : memref<2x32x32xf32, #tpu.memory_space<vmem>>, vector<1x32x32xf32>
    %225 = vector.shape_cast %224 : vector<1x32x32xf32> to vector<32x32xf32>
    %cst_108 = arith.constant dense<0.000000e+00> : vector<16x32xf32>
    %226 = tpu.matmul %216, %225, %cst_108 {dimension_numbers = #tpu.dot_dimension_numbers<[1], [0], [0], [1], [0, 0, 1, 1], [], []>} : vector<16x32xf32>, vector<32x32xf32>, vector<16x32xf32> -> vector<16x32xf32>
    %c1_109 = arith.constant 1 : index
    %c0_110 = arith.constant 0 : index
    %c0_111 = arith.constant 0 : index
    %227 = vector.load %arg8[%c1_109, %c0_110, %c0_111] : memref<2x1x32xf32, #tpu.memory_space<vmem>>, vector<1x1x32xf32>
    %228 = vector.shape_cast %227 : vector<1x1x32xf32> to vector<1x32xf32>
    %229 = vector.broadcast %228 : vector<1x32xf32> to vector<16x32xf32>
    %230 = arith.addf %226, %229 : vector<16x32xf32>
    %c1_112 = arith.constant 1 : index
    %c0_113 = arith.constant 0 : index
    %c0_114 = arith.constant 0 : index
    %231 = vector.load %arg9[%c1_112, %c0_113, %c0_114] : memref<2x32x32xf32, #tpu.memory_space<vmem>>, vector<1x32x32xf32>
    %232 = vector.shape_cast %231 : vector<1x32x32xf32> to vector<32x32xf32>
    %cst_115 = arith.constant dense<0.000000e+00> : vector<16x32xf32>
    %233 = tpu.matmul %216, %232, %cst_115 {dimension_numbers = #tpu.dot_dimension_numbers<[1], [0], [0], [1], [0, 0, 1, 1], [], []>} : vector<16x32xf32>, vector<32x32xf32>, vector<16x32xf32> -> vector<16x32xf32>
    %c1_116 = arith.constant 1 : index
    %c0_117 = arith.constant 0 : index
    %c0_118 = arith.constant 0 : index
    %234 = vector.load %arg10[%c1_116, %c0_117, %c0_118] : memref<2x1x32xf32, #tpu.memory_space<vmem>>, vector<1x1x32xf32>
    %235 = vector.shape_cast %234 : vector<1x1x32xf32> to vector<1x32xf32>
    %236 = vector.broadcast %235 : vector<1x32xf32> to vector<16x32xf32>
    %237 = arith.addf %233, %236 : vector<16x32xf32>
    %cst_119 = arith.constant 0.000000e+00 : f32
    %238 = vector.broadcast %cst_119 : f32 to vector<16x32xf32>
    %239 = vector.extract_strided_slice %1 {offsets = [0, 0, 0], sizes = [1, 1, 32], strides = [1, 1, 1]} : vector<4x1x32xf32> to vector<1x1x32xf32>
    %240 = vector.shape_cast %239 : vector<1x1x32xf32> to vector<1x32xf32>
    %241 = vector.broadcast %240 : vector<1x32xf32> to vector<16x32xf32>
    %242 = arith.mulf %223, %241 : vector<16x32xf32>
    %cst_120 = arith.constant dense<0.000000e+00> : vector<16x16xf32>
    %243 = tpu.matmul %242, %230, %cst_120 {dimension_numbers = #tpu.dot_dimension_numbers<[1], [1], [0], [0], [0, 0, 1, 0], [], []>} : vector<16x32xf32>, vector<16x32xf32>, vector<16x16xf32> -> vector<16x16xf32>
    %244 = arith.addf %243, %0 : vector<16x16xf32>
    %cst_121 = arith.constant dense<0xFF800000> : vector<16xf32>
    %245 = vector.multi_reduction <maximumf>, %244, %cst_121 [1] : vector<16x16xf32> to vector<16xf32>
    %246 = vector.shape_cast %245 : vector<16xf32> to vector<16x1xf32>
    %247 = vector.broadcast %246 : vector<16x1xf32> to vector<16x16xf32>
    %248 = arith.subf %244, %247 : vector<16x16xf32>
    %249 = math.exp %248 : vector<16x16xf32>
    %cst_122 = arith.constant dense<0.000000e+00> : vector<16xf32>
    %250 = vector.multi_reduction <add>, %249, %cst_122 [1] : vector<16x16xf32> to vector<16xf32>
    %251 = vector.shape_cast %250 : vector<16xf32> to vector<16x1xf32>
    %252 = tpu.reciprocal %251 {approx = true} : vector<16x1xf32> -> vector<16x1xf32>
    %253 = vector.broadcast %252 : vector<16x1xf32> to vector<16x16xf32>
    %254 = arith.mulf %249, %253 : vector<16x16xf32>
    %255 = vector.broadcast %240 : vector<1x32xf32> to vector<16x32xf32>
    %256 = arith.mulf %237, %255 : vector<16x32xf32>
    %cst_123 = arith.constant dense<0.000000e+00> : vector<16x32xf32>
    %257 = tpu.matmul %254, %256, %cst_123 {dimension_numbers = #tpu.dot_dimension_numbers<[1], [0], [0], [1], [0, 0, 1, 1], [], []>} : vector<16x16xf32>, vector<16x32xf32>, vector<16x32xf32> -> vector<16x32xf32>
    %258 = arith.addf %238, %257 : vector<16x32xf32>
    %259 = vector.extract_strided_slice %1 {offsets = [1, 0, 0], sizes = [1, 1, 32], strides = [1, 1, 1]} : vector<4x1x32xf32> to vector<1x1x32xf32>
    %260 = vector.shape_cast %259 : vector<1x1x32xf32> to vector<1x32xf32>
    %261 = vector.broadcast %260 : vector<1x32xf32> to vector<16x32xf32>
    %262 = arith.mulf %223, %261 : vector<16x32xf32>
    %cst_124 = arith.constant dense<0.000000e+00> : vector<16x16xf32>
    %263 = tpu.matmul %262, %230, %cst_124 {dimension_numbers = #tpu.dot_dimension_numbers<[1], [1], [0], [0], [0, 0, 1, 0], [], []>} : vector<16x32xf32>, vector<16x32xf32>, vector<16x16xf32> -> vector<16x16xf32>
    %264 = arith.addf %263, %0 : vector<16x16xf32>
    %cst_125 = arith.constant dense<0xFF800000> : vector<16xf32>
    %265 = vector.multi_reduction <maximumf>, %264, %cst_125 [1] : vector<16x16xf32> to vector<16xf32>
    %266 = vector.shape_cast %265 : vector<16xf32> to vector<16x1xf32>
    %267 = vector.broadcast %266 : vector<16x1xf32> to vector<16x16xf32>
    %268 = arith.subf %264, %267 : vector<16x16xf32>
    %269 = math.exp %268 : vector<16x16xf32>
    %cst_126 = arith.constant dense<0.000000e+00> : vector<16xf32>
    %270 = vector.multi_reduction <add>, %269, %cst_126 [1] : vector<16x16xf32> to vector<16xf32>
    %271 = vector.shape_cast %270 : vector<16xf32> to vector<16x1xf32>
    %272 = tpu.reciprocal %271 {approx = true} : vector<16x1xf32> -> vector<16x1xf32>
    %273 = vector.broadcast %272 : vector<16x1xf32> to vector<16x16xf32>
    %274 = arith.mulf %269, %273 : vector<16x16xf32>
    %275 = vector.broadcast %260 : vector<1x32xf32> to vector<16x32xf32>
    %276 = arith.mulf %237, %275 : vector<16x32xf32>
    %cst_127 = arith.constant dense<0.000000e+00> : vector<16x32xf32>
    %277 = tpu.matmul %274, %276, %cst_127 {dimension_numbers = #tpu.dot_dimension_numbers<[1], [0], [0], [1], [0, 0, 1, 1], [], []>} : vector<16x16xf32>, vector<16x32xf32>, vector<16x32xf32> -> vector<16x32xf32>
    %278 = arith.addf %258, %277 : vector<16x32xf32>
    %279 = vector.extract_strided_slice %1 {offsets = [2, 0, 0], sizes = [1, 1, 32], strides = [1, 1, 1]} : vector<4x1x32xf32> to vector<1x1x32xf32>
    %280 = vector.shape_cast %279 : vector<1x1x32xf32> to vector<1x32xf32>
    %281 = vector.broadcast %280 : vector<1x32xf32> to vector<16x32xf32>
    %282 = arith.mulf %223, %281 : vector<16x32xf32>
    %cst_128 = arith.constant dense<0.000000e+00> : vector<16x16xf32>
    %283 = tpu.matmul %282, %230, %cst_128 {dimension_numbers = #tpu.dot_dimension_numbers<[1], [1], [0], [0], [0, 0, 1, 0], [], []>} : vector<16x32xf32>, vector<16x32xf32>, vector<16x16xf32> -> vector<16x16xf32>
    %284 = arith.addf %283, %0 : vector<16x16xf32>
    %cst_129 = arith.constant dense<0xFF800000> : vector<16xf32>
    %285 = vector.multi_reduction <maximumf>, %284, %cst_129 [1] : vector<16x16xf32> to vector<16xf32>
    %286 = vector.shape_cast %285 : vector<16xf32> to vector<16x1xf32>
    %287 = vector.broadcast %286 : vector<16x1xf32> to vector<16x16xf32>
    %288 = arith.subf %284, %287 : vector<16x16xf32>
    %289 = math.exp %288 : vector<16x16xf32>
    %cst_130 = arith.constant dense<0.000000e+00> : vector<16xf32>
    %290 = vector.multi_reduction <add>, %289, %cst_130 [1] : vector<16x16xf32> to vector<16xf32>
    %291 = vector.shape_cast %290 : vector<16xf32> to vector<16x1xf32>
    %292 = tpu.reciprocal %291 {approx = true} : vector<16x1xf32> -> vector<16x1xf32>
    %293 = vector.broadcast %292 : vector<16x1xf32> to vector<16x16xf32>
    %294 = arith.mulf %289, %293 : vector<16x16xf32>
    %295 = vector.broadcast %280 : vector<1x32xf32> to vector<16x32xf32>
    %296 = arith.mulf %237, %295 : vector<16x32xf32>
    %cst_131 = arith.constant dense<0.000000e+00> : vector<16x32xf32>
    %297 = tpu.matmul %294, %296, %cst_131 {dimension_numbers = #tpu.dot_dimension_numbers<[1], [0], [0], [1], [0, 0, 1, 1], [], []>} : vector<16x16xf32>, vector<16x32xf32>, vector<16x32xf32> -> vector<16x32xf32>
    %298 = arith.addf %278, %297 : vector<16x32xf32>
    %299 = vector.extract_strided_slice %1 {offsets = [3, 0, 0], sizes = [1, 1, 32], strides = [1, 1, 1]} : vector<4x1x32xf32> to vector<1x1x32xf32>
    %300 = vector.shape_cast %299 : vector<1x1x32xf32> to vector<1x32xf32>
    %301 = vector.broadcast %300 : vector<1x32xf32> to vector<16x32xf32>
    %302 = arith.mulf %223, %301 : vector<16x32xf32>
    %cst_132 = arith.constant dense<0.000000e+00> : vector<16x16xf32>
    %303 = tpu.matmul %302, %230, %cst_132 {dimension_numbers = #tpu.dot_dimension_numbers<[1], [1], [0], [0], [0, 0, 1, 0], [], []>} : vector<16x32xf32>, vector<16x32xf32>, vector<16x16xf32> -> vector<16x16xf32>
    %304 = arith.addf %303, %0 : vector<16x16xf32>
    %cst_133 = arith.constant dense<0xFF800000> : vector<16xf32>
    %305 = vector.multi_reduction <maximumf>, %304, %cst_133 [1] : vector<16x16xf32> to vector<16xf32>
    %306 = vector.shape_cast %305 : vector<16xf32> to vector<16x1xf32>
    %307 = vector.broadcast %306 : vector<16x1xf32> to vector<16x16xf32>
    %308 = arith.subf %304, %307 : vector<16x16xf32>
    %309 = math.exp %308 : vector<16x16xf32>
    %cst_134 = arith.constant dense<0.000000e+00> : vector<16xf32>
    %310 = vector.multi_reduction <add>, %309, %cst_134 [1] : vector<16x16xf32> to vector<16xf32>
    %311 = vector.shape_cast %310 : vector<16xf32> to vector<16x1xf32>
    %312 = tpu.reciprocal %311 {approx = true} : vector<16x1xf32> -> vector<16x1xf32>
    %313 = vector.broadcast %312 : vector<16x1xf32> to vector<16x16xf32>
    %314 = arith.mulf %309, %313 : vector<16x16xf32>
    %315 = vector.broadcast %300 : vector<1x32xf32> to vector<16x32xf32>
    %316 = arith.mulf %237, %315 : vector<16x32xf32>
    %cst_135 = arith.constant dense<0.000000e+00> : vector<16x32xf32>
    %317 = tpu.matmul %314, %316, %cst_135 {dimension_numbers = #tpu.dot_dimension_numbers<[1], [0], [0], [1], [0, 0, 1, 1], [], []>} : vector<16x16xf32>, vector<16x32xf32>, vector<16x32xf32> -> vector<16x32xf32>
    %318 = arith.addf %298, %317 : vector<16x32xf32>
    %c1_136 = arith.constant 1 : index
    %c0_137 = arith.constant 0 : index
    %c0_138 = arith.constant 0 : index
    %319 = vector.load %arg11[%c1_136, %c0_137, %c0_138] : memref<2x32x32xf32, #tpu.memory_space<vmem>>, vector<1x32x32xf32>
    %320 = vector.shape_cast %319 : vector<1x32x32xf32> to vector<32x32xf32>
    %cst_139 = arith.constant dense<0.000000e+00> : vector<16x32xf32>
    %321 = tpu.matmul %318, %320, %cst_139 {dimension_numbers = #tpu.dot_dimension_numbers<[1], [0], [0], [1], [0, 0, 1, 1], [], []>} : vector<16x32xf32>, vector<32x32xf32>, vector<16x32xf32> -> vector<16x32xf32>
    %c1_140 = arith.constant 1 : index
    %c0_141 = arith.constant 0 : index
    %c0_142 = arith.constant 0 : index
    %322 = vector.load %arg12[%c1_140, %c0_141, %c0_142] : memref<2x1x32xf32, #tpu.memory_space<vmem>>, vector<1x1x32xf32>
    %323 = vector.shape_cast %322 : vector<1x1x32xf32> to vector<1x32xf32>
    %324 = vector.broadcast %323 : vector<1x32xf32> to vector<16x32xf32>
    %325 = arith.addf %321, %324 : vector<16x32xf32>
    %326 = arith.addf %325, %216 : vector<16x32xf32>
    %c1_143 = arith.constant 1 : index
    %c0_144 = arith.constant 0 : index
    %c0_145 = arith.constant 0 : index
    %327 = vector.load %arg13[%c1_143, %c0_144, %c0_145] : memref<2x1x32xf32, #tpu.memory_space<vmem>>, vector<1x1x32xf32>
    %328 = vector.shape_cast %327 : vector<1x1x32xf32> to vector<1x32xf32>
    %c1_146 = arith.constant 1 : index
    %c0_147 = arith.constant 0 : index
    %c0_148 = arith.constant 0 : index
    %329 = vector.load %arg14[%c1_146, %c0_147, %c0_148] : memref<2x1x32xf32, #tpu.memory_space<vmem>>, vector<1x1x32xf32>
    %330 = vector.shape_cast %329 : vector<1x1x32xf32> to vector<1x32xf32>
    %cst_149 = arith.constant dense<0.000000e+00> : vector<16xf32>
    %331 = vector.multi_reduction <add>, %326, %cst_149 [1] : vector<16x32xf32> to vector<16xf32>
    %332 = vector.shape_cast %331 : vector<16xf32> to vector<16x1xf32>
    %cst_150 = arith.constant 3.200000e+01 : f32
    %333 = vector.broadcast %cst_150 : f32 to vector<16x1xf32>
    %334 = arith.divf %332, %333 : vector<16x1xf32>
    %335 = vector.broadcast %334 : vector<16x1xf32> to vector<16x32xf32>
    %336 = arith.subf %326, %335 : vector<16x32xf32>
    %337 = arith.mulf %336, %336 : vector<16x32xf32>
    %cst_151 = arith.constant dense<0.000000e+00> : vector<16xf32>
    %338 = vector.multi_reduction <add>, %337, %cst_151 [1] : vector<16x32xf32> to vector<16xf32>
    %339 = vector.shape_cast %338 : vector<16xf32> to vector<16x1xf32>
    %cst_152 = arith.constant 3.200000e+01 : f32
    %340 = vector.broadcast %cst_152 : f32 to vector<16x1xf32>
    %341 = arith.divf %339, %340 : vector<16x1xf32>
    %342 = vector.broadcast %334 : vector<16x1xf32> to vector<16x32xf32>
    %343 = arith.subf %326, %342 : vector<16x32xf32>
    %cst_153 = arith.constant 9.99999996E-13 : f32
    %344 = vector.broadcast %cst_153 : f32 to vector<16x1xf32>
    %345 = arith.addf %341, %344 : vector<16x1xf32>
    %346 = math.rsqrt %345 : vector<16x1xf32>
    %347 = vector.broadcast %346 : vector<16x1xf32> to vector<16x32xf32>
    %348 = arith.mulf %343, %347 : vector<16x32xf32>
    %349 = vector.broadcast %328 : vector<1x32xf32> to vector<16x32xf32>
    %350 = arith.mulf %348, %349 : vector<16x32xf32>
    %351 = vector.broadcast %330 : vector<1x32xf32> to vector<16x32xf32>
    %352 = arith.addf %350, %351 : vector<16x32xf32>
    %c1_154 = arith.constant 1 : index
    %c0_155 = arith.constant 0 : index
    %c0_156 = arith.constant 0 : index
    %353 = vector.load %arg15[%c1_154, %c0_155, %c0_156] : memref<2x32x64xf32, #tpu.memory_space<vmem>>, vector<1x32x64xf32>
    %354 = vector.shape_cast %353 : vector<1x32x64xf32> to vector<32x64xf32>
    %cst_157 = arith.constant dense<0.000000e+00> : vector<16x64xf32>
    %355 = tpu.matmul %352, %354, %cst_157 {dimension_numbers = #tpu.dot_dimension_numbers<[1], [0], [0], [1], [0, 0, 1, 1], [], []>} : vector<16x32xf32>, vector<32x64xf32>, vector<16x64xf32> -> vector<16x64xf32>
    %c1_158 = arith.constant 1 : index
    %c0_159 = arith.constant 0 : index
    %c0_160 = arith.constant 0 : index
    %356 = vector.load %arg16[%c1_158, %c0_159, %c0_160] : memref<2x1x64xf32, #tpu.memory_space<vmem>>, vector<1x1x64xf32>
    %357 = vector.shape_cast %356 : vector<1x1x64xf32> to vector<1x64xf32>
    %358 = vector.broadcast %357 : vector<1x64xf32> to vector<16x64xf32>
    %359 = arith.addf %355, %358 : vector<16x64xf32>
    %cst_161 = arith.constant 5.000000e-01 : f32
    %360 = vector.broadcast %cst_161 : f32 to vector<16x64xf32>
    %361 = arith.mulf %360, %359 : vector<16x64xf32>
    %cst_162 = arith.constant 4.471500e-02 : f32
    %362 = vector.broadcast %cst_162 : f32 to vector<16x64xf32>
    %363 = arith.mulf %362, %359 : vector<16x64xf32>
    %364 = arith.mulf %363, %359 : vector<16x64xf32>
    %365 = arith.mulf %364, %359 : vector<16x64xf32>
    %366 = arith.addf %359, %365 : vector<16x64xf32>
    %cst_163 = arith.constant 0.797884583 : f32
    %367 = vector.broadcast %cst_163 : f32 to vector<16x64xf32>
    %368 = arith.mulf %367, %366 : vector<16x64xf32>
    %369 = math.tanh %368 : vector<16x64xf32>
    %cst_164 = arith.constant 1.000000e+00 : f32
    %370 = vector.broadcast %cst_164 : f32 to vector<16x64xf32>
    %371 = arith.addf %370, %369 : vector<16x64xf32>
    %372 = arith.mulf %361, %371 : vector<16x64xf32>
    %c1_165 = arith.constant 1 : index
    %c0_166 = arith.constant 0 : index
    %c0_167 = arith.constant 0 : index
    %373 = vector.load %arg17[%c1_165, %c0_166, %c0_167] : memref<2x64x32xf32, #tpu.memory_space<vmem>>, vector<1x64x32xf32>
    %374 = vector.shape_cast %373 : vector<1x64x32xf32> to vector<64x32xf32>
    %cst_168 = arith.constant dense<0.000000e+00> : vector<16x32xf32>
    %375 = tpu.matmul %372, %374, %cst_168 {dimension_numbers = #tpu.dot_dimension_numbers<[1], [0], [0], [1], [0, 0, 1, 1], [], []>} : vector<16x64xf32>, vector<64x32xf32>, vector<16x32xf32> -> vector<16x32xf32>
    %c1_169 = arith.constant 1 : index
    %c0_170 = arith.constant 0 : index
    %c0_171 = arith.constant 0 : index
    %376 = vector.load %arg18[%c1_169, %c0_170, %c0_171] : memref<2x1x32xf32, #tpu.memory_space<vmem>>, vector<1x1x32xf32>
    %377 = vector.shape_cast %376 : vector<1x1x32xf32> to vector<1x32xf32>
    %378 = vector.broadcast %377 : vector<1x32xf32> to vector<16x32xf32>
    %379 = arith.addf %375, %378 : vector<16x32xf32>
    %380 = arith.addf %379, %352 : vector<16x32xf32>
    %c1_172 = arith.constant 1 : index
    %c0_173 = arith.constant 0 : index
    %c0_174 = arith.constant 0 : index
    %381 = vector.load %arg19[%c1_172, %c0_173, %c0_174] : memref<2x1x32xf32, #tpu.memory_space<vmem>>, vector<1x1x32xf32>
    %382 = vector.shape_cast %381 : vector<1x1x32xf32> to vector<1x32xf32>
    %c1_175 = arith.constant 1 : index
    %c0_176 = arith.constant 0 : index
    %c0_177 = arith.constant 0 : index
    %383 = vector.load %arg20[%c1_175, %c0_176, %c0_177] : memref<2x1x32xf32, #tpu.memory_space<vmem>>, vector<1x1x32xf32>
    %384 = vector.shape_cast %383 : vector<1x1x32xf32> to vector<1x32xf32>
    %cst_178 = arith.constant dense<0.000000e+00> : vector<16xf32>
    %385 = vector.multi_reduction <add>, %380, %cst_178 [1] : vector<16x32xf32> to vector<16xf32>
    %386 = vector.shape_cast %385 : vector<16xf32> to vector<16x1xf32>
    %cst_179 = arith.constant 3.200000e+01 : f32
    %387 = vector.broadcast %cst_179 : f32 to vector<16x1xf32>
    %388 = arith.divf %386, %387 : vector<16x1xf32>
    %389 = vector.broadcast %388 : vector<16x1xf32> to vector<16x32xf32>
    %390 = arith.subf %380, %389 : vector<16x32xf32>
    %391 = arith.mulf %390, %390 : vector<16x32xf32>
    %cst_180 = arith.constant dense<0.000000e+00> : vector<16xf32>
    %392 = vector.multi_reduction <add>, %391, %cst_180 [1] : vector<16x32xf32> to vector<16xf32>
    %393 = vector.shape_cast %392 : vector<16xf32> to vector<16x1xf32>
    %cst_181 = arith.constant 3.200000e+01 : f32
    %394 = vector.broadcast %cst_181 : f32 to vector<16x1xf32>
    %395 = arith.divf %393, %394 : vector<16x1xf32>
    %396 = vector.broadcast %388 : vector<16x1xf32> to vector<16x32xf32>
    %397 = arith.subf %380, %396 : vector<16x32xf32>
    %cst_182 = arith.constant 9.99999996E-13 : f32
    %398 = vector.broadcast %cst_182 : f32 to vector<16x1xf32>
    %399 = arith.addf %395, %398 : vector<16x1xf32>
    %400 = math.rsqrt %399 : vector<16x1xf32>
    %401 = vector.broadcast %400 : vector<16x1xf32> to vector<16x32xf32>
    %402 = arith.mulf %397, %401 : vector<16x32xf32>
    %403 = vector.broadcast %382 : vector<1x32xf32> to vector<16x32xf32>
    %404 = arith.mulf %402, %403 : vector<16x32xf32>
    %405 = vector.broadcast %384 : vector<1x32xf32> to vector<16x32xf32>
    %406 = arith.addf %404, %405 : vector<16x32xf32>
    %c0_183 = arith.constant 0 : index
    %c0_184 = arith.constant 0 : index
    %407 = vector.load %arg21[%c0_183, %c0_184] : memref<1x32xf32, #tpu.memory_space<vmem>>, vector<1x32xf32>
    %408 = vector.broadcast %407 : vector<1x32xf32> to vector<16x32xf32>
    %409 = arith.mulf %406, %408 : vector<16x32xf32>
    %cst_185 = arith.constant dense<0.000000e+00> : vector<16xf32>
    %410 = vector.multi_reduction <add>, %409, %cst_185 [1] : vector<16x32xf32> to vector<16xf32>
    %411 = vector.shape_cast %410 : vector<16xf32> to vector<16x1xf32>
    %c0_186 = arith.constant 0 : index
    %c0_187 = arith.constant 0 : index
    %412 = vector.load %arg22[%c0_186, %c0_187] : memref<1x1xf32, #tpu.memory_space<vmem>>, vector<1x1xf32>
    %413 = vector.broadcast %412 : vector<1x1xf32> to vector<16x1xf32>
    %414 = arith.addf %411, %413 : vector<16x1xf32>
    %c0_188 = arith.constant 0 : index
    %c0_189 = arith.constant 0 : index
    %415 = vector.load %arg23[%c0_188, %c0_189] : memref<16x1xf32, #tpu.memory_space<vmem>>, vector<16x1xf32>
    tpu.vector_store %arg23[%c0_188, %c0_189], %414 {strides = array<i32>} : memref<16x1xf32, #tpu.memory_space<vmem>>, vector<16x1xf32>,
    return
  }
}

</mosaic_0001>

<llo_original>
// kernel: rhythmic_forward.1
$region0: #{rhythmic_forward.1}
  #allocation0 [shape = 'u32[]', space=smem, size = 0x4, offset = 0x4, fixed_abs, tag = 'smem constant byte address 0x4 - core index']
  #allocation1 [shape = 'u32[72,128]{1,0:T(1,128)}', space=vmem, size = 0x9000, scoped, tag = 'internal scratch']
  #allocation2 [shape = 'f32[1,1]{1,0:T(1,128)S(1)}', space=vmem, size = 0x200, scoped, tag = 'scoped memory for rhythmic_forward.1']
  %s0 = inlined_call_operand.vmem [shape: f32[16,32], index: 0, kind: input, shape index: {}]
  %s1 = inlined_call_operand.vmem [shape: f32[16,16], index: 1, kind: input, shape index: {}]
  %s2 = inlined_call_operand.vmem [shape: f32[4,1,32], index: 2, kind: input, shape index: {}]
  %s3 = inlined_call_operand.vmem [shape: f32[1,32], index: 3, kind: input, shape index: {}]
  %s4 = inlined_call_operand.vmem [shape: f32[1,32], index: 4, kind: input, shape index: {}]
  %s5 = inlined_call_operand.vmem [shape: f32[2,32,32], index: 5, kind: input, shape index: {}]
  %s6 = inlined_call_operand.vmem [shape: f32[2,1,32], index: 6, kind: input, shape index: {}]
  %s7 = inlined_call_operand.vmem [shape: f32[2,32,32], index: 7, kind: input, shape index: {}]
  %s8 = inlined_call_operand.vmem [shape: f32[2,1,32], index: 8, kind: input, shape index: {}]
  %s9 = inlined_call_operand.vmem [shape: f32[2,32,32], index: 9, kind: input, shape index: {}]
  %s10 = inlined_call_operand.vmem [shape: f32[2,1,32], index: 10, kind: input, shape index: {}]
  %s11 = inlined_call_operand.vmem [shape: f32[2,32,32], index: 11, kind: input, shape index: {}]
  %s12 = inlined_call_operand.vmem [shape: f32[2,1,32], index: 12, kind: input, shape index: {}]
  %s13 = inlined_call_operand.vmem [shape: f32[2,1,32], index: 13, kind: input, shape index: {}]
  %s14 = inlined_call_operand.vmem [shape: f32[2,1,32], index: 14, kind: input, shape index: {}]
  %s15 = inlined_call_operand.vmem [shape: f32[2,32,64], index: 15, kind: input, shape index: {}]
  %s16 = inlined_call_operand.vmem [shape: f32[2,1,64], index: 16, kind: input, shape index: {}]
  %s17 = inlined_call_operand.vmem [shape: f32[2,64,32], index: 17, kind: input, shape index: {}]
  %s18 = inlined_call_operand.vmem [shape: f32[2,1,32], index: 18, kind: input, shape index: {}]
  %s19 = inlined_call_operand.vmem [shape: f32[2,1,32], index: 19, kind: input, shape index: {}]
  %s20 = inlined_call_operand.vmem [shape: f32[2,1,32], index: 20, kind: input, shape index: {}]
  %s21 = inlined_call_operand.vmem [shape: f32[1,32], index: 21, kind: input, shape index: {}]
  %s22 = inlined_call_operand.<no memory space> [shape: f32[1,1], index: 22, kind: input, shape index: {}]
  %s23 = inlined_call_operand.vmem [shape: f32[16,1], index: 23, kind: output, shape index: {}]
  %s24 = sld [smem:[#allocation0]]
  $region102: #{rhythmic_forward.1} parent=0
    _
  %s26 = ssub.s32 1, %s24
  %s27 = scalar_select 0, %s26, %s24
  %v28 = vstv %s22
  %29 = vst [vmem:[#allocation2] sm:$0x1] %v28
  // Predicated region
  $region2: #{rhythmic_forward.1} parent=0 // pred_check
    _
  $region3: #{rhythmic_forward.1} parent=0 // pred_check_branch
    %31 = sbr.rel (0) target = $region5
  $region4: #{rhythmic_forward.1} parent=0 // pred_region
    _
  $region5: #{rhythmic_forward.1} parent=0 // pred_fallthru
    _
  // Predicated region
  $region6: #{rhythmic_forward.1} parent=0 // pred_check
    _
  $region7: #{rhythmic_forward.1} parent=0 // pred_check_branch
    %33 = sbr.rel (0) target = $region9
  $region8: #{rhythmic_forward.1} parent=0 // pred_region
    _
  $region9: #{rhythmic_forward.1} parent=0 // pred_fallthru
    _
  // Predicated region
  $region10: #{rhythmic_forward.1} parent=0 // pred_check
    _
  $region11: #{rhythmic_forward.1} parent=0 // pred_check_branch
    %35 = sbr.rel (0) target = $region13
  $region12: #{rhythmic_forward.1} parent=0 // pred_region
    _
  $region13: #{rhythmic_forward.1} parent=0 // pred_fallthru
    _
  // Predicated region
  $region14: #{rhythmic_forward.1} parent=0 // pred_check
    _
  $region15: #{rhythmic_forward.1} parent=0 // pred_check_branch
    %37 = sbr.rel (0) target = $region17
  $region16: #{rhythmic_forward.1} parent=0 // pred_region
    _
  $region17: #{rhythmic_forward.1} parent=0 // pred_fallthru
    _
  // Predicated region
  $region18: #{rhythmic_forward.1} parent=0 // pred_check
    _
  $region19: #{rhythmic_forward.1} parent=0 // pred_check_branch
    %39 = sbr.rel (0) target = $region21
  $region20: #{rhythmic_forward.1} parent=0 // pred_region
    _
  $region21: #{rhythmic_forward.1} parent=0 // pred_fallthru
    _
  // Predicated region
  $region22: #{rhythmic_forward.1} parent=0 // pred_check
    _
  $region23: #{rhythmic_forward.1} parent=0 // pred_check_branch
    %41 = sbr.rel (0) target = $region25
  $region24: #{rhythmic_forward.1} parent=0 // pred_region
    _
  $region25: #{rhythmic_forward.1} parent=0 // pred_fallthru
    _
  // Predicated region
  $region26: #{rhythmic_forward.1} parent=0 // pred_check
    _
  $region27: #{rhythmic_forward.1} parent=0 // pred_check_branch
    %43 = sbr.rel (0) target = $region29
  $region28: #{rhythmic_forward.1} parent=0 // pred_region
    _
  $region29: #{rhythmic_forward.1} parent=0 // pred_fallthru
    _
  // Predicated region
  $region30: #{rhythmic_forward.1} parent=0 // pred_check
    _
  $region31: #{rhythmic_forward.1} parent=0 // pred_check_branch
    %45 = sbr.rel (0) target = $region33
  $region32: #{rhythmic_forward.1} parent=0 // pred_region
    _
  $region33: #{rhythmic_forward.1} parent=0 // pred_fallthru
    _
  // Predicated region
  $region34: #{rhythmic_forward.1} parent=0 // pred_check
    _
  $region35: #{rhythmic_forward.1} parent=0 // pred_check_branch
    %47 = sbr.rel (0) target = $region37
  $region36: #{rhythmic_forward.1} parent=0 // pred_region
    _
  $region37: #{rhythmic_forward.1} parent=0 // pred_fallthru
    _
  // Predicated region
  $region38: #{rhythmic_forward.1} parent=0 // pred_check
    _
  $region39: #{rhythmic_forward.1} parent=0 // pred_check_branch
    %49 = sbr.rel (0) target = $region41
  $region40: #{rhythmic_forward.1} parent=0 // pred_region
    _
  $region41: #{rhythmic_forward.1} parent=0 // pred_fallthru
    _
  // Predicated region
  $region42: #{rhythmic_forward.1} parent=0 // pred_check
    _
  $region43: #{rhythmic_forward.1} parent=0 // pred_check_branch
    %51 = sbr.rel (0) target = $region45
  $region44: #{rhythmic_forward.1} parent=0 // pred_region
    _
  $region45: #{rhythmic_forward.1} parent=0 // pred_fallthru
    _
  // Predicated region
  $region46: #{rhythmic_forward.1} parent=0 // pred_check
    _
  $region47: #{rhythmic_forward.1} parent=0 // pred_check_branch
    %53 = sbr.rel (0) target = $region49
  $region48: #{rhythmic_forward.1} parent=0 // pred_region
    _
  $region49: #{rhythmic_forward.1} parent=0 // pred_fallthru
    _
  // Predicated region
  $region50: #{rhythmic_forward.1} parent=0 // pred_check
    _
  $region51: #{rhythmic_forward.1} parent=0 // pred_check_branch
    %55 = sbr.rel (0) target = $region53
  $region52: #{rhythmic_forward.1} parent=0 // pred_region
    _
  $region53: #{rhythmic_forward.1} parent=0 // pred_fallthru
    _
  // Predicated region
  $region54: #{rhythmic_forward.1} parent=0 // pred_check
    _
  $region55: #{rhythmic_forward.1} parent=0 // pred_check_branch
    %57 = sbr.rel (0) target = $region57
  $region56: #{rhythmic_forward.1} parent=0 // pred_region
    _
  $region57: #{rhythmic_forward.1} parent=0 // pred_fallthru
    _
  // Predicated region
  $region58: #{rhythmic_forward.1} parent=0 // pred_check
    _
  $region59: #{rhythmic_forward.1} parent=0 // pred_check_branch
    %59 = sbr.rel (0) target = $region61
  $region60: #{rhythmic_forward.1} parent=0 // pred_region
    _
  $region61: #{rhythmic_forward.1} parent=0 // pred_fallthru
    _
  // Predicated region
  $region62: #{rhythmic_forward.1} parent=0 // pred_check
    _
  $region63: #{rhythmic_forward.1} parent=0 // pred_check_branch
    %61 = sbr.rel (0) target = $region65
  $region64: #{rhythmic_forward.1} parent=0 // pred_region
    _
  $region65: #{rhythmic_forward.1} parent=0 // pred_fallthru
    _
  // Predicated region
  $region66: #{rhythmic_forward.1} parent=0 // pred_check
    _
  $region67: #{rhythmic_forward.1} parent=0 // pred_check_branch
    %63 = sbr.rel (0) target = $region69
  $region68: #{rhythmic_forward.1} parent=0 // pred_region
    _
  $region69: #{rhythmic_forward.1} parent=0 // pred_fallthru
    _
  // Predicated region
  $region70: #{rhythmic_forward.1} parent=0 // pred_check
    _
  $region71: #{rhythmic_forward.1} parent=0 // pred_check_branch
    %65 = sbr.rel (0) target = $region73
  $region72: #{rhythmic_forward.1} parent=0 // pred_region
    _
  $region73: #{rhythmic_forward.1} parent=0 // pred_fallthru
    _
  // Predicated region
  $region74: #{rhythmic_forward.1} parent=0 // pred_check
    _
  $region75: #{rhythmic_forward.1} parent=0 // pred_check_branch
    %67 = sbr.rel (0) target = $region77
  $region76: #{rhythmic_forward.1} parent=0 // pred_region
    _
  $region77: #{rhythmic_forward.1} parent=0 // pred_fallthru
    _
  // Predicated region
  $region78: #{rhythmic_forward.1} parent=0 // pred_check
    _
  $region79: #{rhythmic_forward.1} parent=0 // pred_check_branch
    %69 = sbr.rel (0) target = $region81
  $region80: #{rhythmic_forward.1} parent=0 // pred_region
    _
  $region81: #{rhythmic_forward.1} parent=0 // pred_fallthru
    _
  // Predicated region
  $region82: #{rhythmic_forward.1} parent=0 // pred_check
    _
  $region83: #{rhythmic_forward.1} parent=0 // pred_check_branch
    %71 = sbr.rel (0) target = $region85
  $region84: #{rhythmic_forward.1} parent=0 // pred_region
    _
  $region85: #{rhythmic_forward.1} parent=0 // pred_fallthru
    _
  // Predicated region
  $region86: #{rhythmic_forward.1} parent=0 // pred_check
    _
  $region87: #{rhythmic_forward.1} parent=0 // pred_check_branch
    %73 = sbr.rel (0) target = $region89
  $region88: #{rhythmic_forward.1} parent=0 // pred_region
    _
  $region89: #{rhythmic_forward.1} parent=0 // pred_fallthru
    _
  // Predicated region
  $region90: #{rhythmic_forward.1} parent=0 // pred_check
    _
  $region91: #{rhythmic_forward.1} parent=0 // pred_check_branch
    %75 = sbr.rel (0) target = $region93
  $region92: #{rhythmic_forward.1} parent=0 // pred_region
    _
  $region93: #{rhythmic_forward.1} parent=0 // pred_fallthru
    _
  %v76 = vld [vmem:[%s1] sm:$0xff]
  %v77 = vld [vmem:[%s1 + $0x8] sm:$0xff]
  %v78 = vld [vmem:[%s2] sm:$0x1]
  %v79 = vld [vmem:[%s2 + $0x1] sm:$0x1]
  %v80 = vld [vmem:[%s2 + $0x2] sm:$0x1]
  %v81 = vld [vmem:[%s2 + $0x3] sm:$0x1]
  %v82 = vld [vmem:[%s0] sm:$0xff]
  %v83 = vld [vmem:[%s0 + $0x8] sm:$0xff]
  %v84 = vld [vmem:[%s3] sm:$0x1]
  %v85 = vld [vmem:[%s4] sm:$0x1]
  %vm86 = vcmask 261120
  %v87 = vsel %vm86, %v82, 0.0
  %88 = vadd.xlane.f32.xlu0 %v87
  %v89 = vpop.xlane.xlu0 %88
  %v90 = vsel %vm86, %v83, 0.0
  %91 = vadd.xlane.f32.xlu0 %v90
  %v92 = vpop.xlane.xlu0 %91
  %v93 = vrcp.pop 32.0
  %v94 = vmul.f32 32.0, %v93
  %v95 = vsub.f32 1.0, %v94
  %v96 = vmul.f32 %v93, %v95
  %v97 = vadd.f32 %v93, %v96
  %vm98 = vweird.f32 %v93
  %v99 = vsel %vm98, %v93, %v97
  %v100 = vmul.f32 %v89, %v99
  %v101 = vmul.f32 %v92, %v99
  %v102 = vsub.f32 %v82, %v100
  %v103 = vsub.f32 %v83, %v101
  %v104 = vmul.f32 %v102, %v102
  %v105 = vmul.f32 %v103, %v103
  %v106 = vsel %vm86, %v104, 0.0
  %107 = vadd.xlane.f32.xlu0 %v106
  %v108 = vpop.xlane.xlu0 %107
  %v109 = vsel %vm86, %v105, 0.0
  %110 = vadd.xlane.f32.xlu0 %v109
  %v111 = vpop.xlane.xlu0 %110
  %v112 = vmul.f32 %v108, %v99
  %v113 = vmul.f32 %v111, %v99
  %v114 = vadd.f32 %v112, 1e-12
  %v115 = vadd.f32 %v113, 1e-12
  %v116 = vrsqrt.pop %v114
  %v117 = vmul.f32 %v116, %v114
  %v118 = vmul.f32 %v117, %v116
  %v119 = vmul.f32 0.5, %v118
  %v120 = vsub.f32 1.5, %v119
  %v121 = vmul.f32 %v116, %v120
  %vm122 = vweird.f32 %v114
  %vm123 = vweird.f32 %v116
  %vm124 = vmor %vm122, %vm123
  %v125 = vsel %vm124, %v116, %v121
  %v126 = vrsqrt.pop %v115
  %v127 = vmul.f32 %v126, %v115
  %v128 = vmul.f32 %v127, %v126
  %v129 = vmul.f32 0.5, %v128
  %v130 = vsub.f32 1.5, %v129
  %v131 = vmul.f32 %v126, %v130
  %vm132 = vweird.f32 %v115
  %vm133 = vweird.f32 %v126
  %vm134 = vmor %vm132, %vm133
  %v135 = vsel %vm134, %v126, %v131
  %v136 = vmul.f32 %v102, %v125
  %v137 = vmul.f32 %v103, %v135
  %v139 = vperm.slane %v84, 0
  %v141 = vmul.f32 %v136, %v139
  %v142 = vmul.f32 %v137, %v139
  %v144 = vperm.slane %v85, 0
  %v146 = vadd.f32 %v141, %v144
  %v147 = vadd.f32 %v142, %v144
  %v148 = vld [vmem:[%s5] sm:$0xff]
  %v149 = vld [vmem:[%s5 + $0x8] sm:$0xff]
  %v150 = vld [vmem:[%s5 + $0x10] sm:$0xff]
  %v151 = vld [vmem:[%s5 + $0x18] sm:$0xff]
  %v152 = vld [vmem:[%s6] sm:$0x1]
  %v154 = vperm.slane %v152, 0
  %v157 = vsel %vm86, %v146, 0
  %v160 = vsel %vm86, %v147, 0
  %162 = vmatpush.msra.mxu0 0.0
  %163 = vmatpush.msra.mxu0 0.0
  %164 = vmatpush.msra.mxu0 0.0
  %165 = vmatpush.msra.mxu0 0.0
  %166 = vmatpush.msra.mxu0 0.0
  %167 = vmatpush.msra.mxu0 0.0
  %168 = vmatpush.msra.mxu0 0.0
  %169 = vmatpush.msra.mxu0 0.0
  %170 = vmatpush.msra.mxu0 0.0
  %171 = vmatpush.msra.mxu0 0.0
  %172 = vmatpush.msra.mxu0 0.0
  %173 = vmatpush.msra.mxu0 0.0
  %174 = vmatpush.msra.mxu0 %v151
  %175 = vmatpush.msra.mxu0 %v150
  %176 = vmatpush.msra.mxu0 %v149
  %177 = vmatpush.msra.mxu0 %v148
  %178 = vmatmul.f32.gmra.mxu0 %v157
  %v179 = vpop.f32.mrf.mxu0
  %v180 = vadd.f32 %v154, %v179
  %181 = vmatmul.f32.gmra.mxu0 %v160
  %v182 = vpop.f32.mrf.mxu0
  %v183 = vadd.f32 %v154, %v182
  %184 = vdwg.mxu0
  %v185 = vld [vmem:[%s7] sm:$0xff]
  %v186 = vld [vmem:[%s7 + $0x8] sm:$0xff]
  %v187 = vld [vmem:[%s7 + $0x10] sm:$0xff]
  %v188 = vld [vmem:[%s7 + $0x18] sm:$0xff]
  %v189 = vld [vmem:[%s8] sm:$0x1]
  %v191 = vperm.slane %v189, 0
  %193 = vmatpush.msra.mxu0 0.0
  %194 = vmatpush.msra.mxu0 0.0
  %195 = vmatpush.msra.mxu0 0.0
  %196 = vmatpush.msra.mxu0 0.0
  %197 = vmatpush.msra.mxu0 0.0
  %198 = vmatpush.msra.mxu0 0.0
  %199 = vmatpush.msra.mxu0 0.0
  %200 = vmatpush.msra.mxu0 0.0
  %201 = vmatpush.msra.mxu0 0.0
  %202 = vmatpush.msra.mxu0 0.0
  %203 = vmatpush.msra.mxu0 0.0
  %204 = vmatpush.msra.mxu0 0.0
  %205 = vmatpush.msra.mxu0 %v188
  %206 = vmatpush.msra.mxu0 %v187
  %207 = vmatpush.msra.mxu0 %v186
  %208 = vmatpush.msra.mxu0 %v185
  %209 = vmatmul.f32.gmra.mxu0 %v157
  %v210 = vpop.f32.mrf.mxu0
  %v211 = vadd.f32 %v191, %v210
  %212 = vmatmul.f32.gmra.mxu0 %v160
  %v213 = vpop.f32.mrf.mxu0
  %v214 = vadd.f32 %v191, %v213
  %215 = vdwg.mxu0
  %v216 = vld [vmem:[%s9] sm:$0xff]
  %v217 = vld [vmem:[%s9 + $0x8] sm:$0xff]
  %v218 = vld [vmem:[%s9 + $0x10] sm:$0xff]
  %v219 = vld [vmem:[%s9 + $0x18] sm:$0xff]
  %v220 = vld [vmem:[%s10] sm:$0x1]
  %v222 = vperm.slane %v220, 0
  %224 = vmatpush.msra.mxu0 0.0
  %225 = vmatpush.msra.mxu0 0.0
  %226 = vmatpush.msra.mxu0 0.0
  %227 = vmatpush.msra.mxu0 0.0
  %228 = vmatpush.msra.mxu0 0.0
  %229 = vmatpush.msra.mxu0 0.0
  %230 = vmatpush.msra.mxu0 0.0
  %231 = vmatpush.msra.mxu0 0.0
  %232 = vmatpush.msra.mxu0 0.0
  %233 = vmatpush.msra.mxu0 0.0
  %234 = vmatpush.msra.mxu0 0.0
  %235 = vmatpush.msra.mxu0 0.0
  %236 = vmatpush.msra.mxu0 %v219
  %237 = vmatpush.msra.mxu0 %v218
  %238 = vmatpush.msra.mxu0 %v217
  %239 = vmatpush.msra.mxu0 %v216
  %240 = vmatmul.f32.gmra.mxu0 %v157
  %v241 = vpop.f32.mrf.mxu0
  %v242 = vadd.f32 %v222, %v241
  %243 = vmatmul.f32.gmra.mxu0 %v160
  %v244 = vpop.f32.mrf.mxu0
  %v245 = vadd.f32 %v222, %v244
  %246 = vdwg.mxu0
  %v248 = vperm.slane %v78, 0
  %v250 = vmul.f32 %v180, %v248
  %v251 = vmul.f32 %v183, %v248
  %v253 = vsel %vm86, %v250, 0
  %v256 = vsel %vm86, %v251, 0
  %v259 = vsel %vm86, %v211, 0
  %v262 = vsel %vm86, %v214, 0
  %264 = vmatpush.xpose.msra.mxu0 0.0
  %265 = vmatpush.xpose.msra.mxu0 0.0
  %266 = vmatpush.xpose.msra.mxu0 0.0
  %267 = vmatpush.xpose.msra.mxu0 0.0
  %268 = vmatpush.xpose.msra.mxu0 0.0
  %269 = vmatpush.xpose.msra.mxu0 0.0
  %270 = vmatpush.xpose.msra.mxu0 0.0
  %271 = vmatpush.xpose.msra.mxu0 0.0
  %272 = vmatpush.xpose.msra.mxu0 0.0
  %273 = vmatpush.xpose.msra.mxu0 0.0
  %274 = vmatpush.xpose.msra.mxu0 0.0
  %275 = vmatpush.xpose.msra.mxu0 0.0
  %276 = vmatpush.xpose.msra.mxu0 0.0
  %277 = vmatpush.xpose.msra.mxu0 0.0
  %278 = vmatpush.xpose.msra.mxu0 %v262
  %279 = vmatpush.xpose.msra.mxu0 %v259
  %280 = vmatmul.f32.gmra.mxu0 %v253
  %v281 = vpop.f32.mrf.mxu0
  %v282 = vadd.f32 %v76, %v281
  %283 = vmatmul.f32.gmra.mxu0 %v256
  %v284 = vpop.f32.mrf.mxu0
  %v285 = vadd.f32 %v77, %v284
  %286 = vdwg.mxu0
  %vm287 = vcmask 130048
  %v288 = vsel %vm287, %v282, -inf
  %289 = vmax.xlane.f32.xlu0 %v288
  %v290 = vpop.xlane.xlu0 %289
  %v291 = vsel %vm287, %v285, -inf
  %292 = vmax.xlane.f32.xlu0 %v291
  %v293 = vpop.xlane.xlu0 %292
  %v294 = vsub.f32 %v282, %v290
  %v295 = vsub.f32 %v285, %v293
  %v296 = vmul.f32 %v294, 1.442695
  %v297 = vpow.pop %v296
  %v298 = vmul.f32 %v295, 1.442695
  %v299 = vpow.pop %v298
  %v300 = vsel %vm287, %v297, 0.0
  %301 = vadd.xlane.f32.xlu0 %v300
  %v302 = vpop.xlane.xlu0 %301
  %v303 = vsel %vm287, %v299, 0.0
  %304 = vadd.xlane.f32.xlu0 %v303
  %v305 = vpop.xlane.xlu0 %304
  %v306 = vrcp.pop %v302
  %v307 = vrcp.pop %v305
  %v308 = vmul.f32 %v297, %v306
  %v309 = vmul.f32 %v299, %v307
  %v310 = vmul.f32 %v242, %v248
  %v311 = vmul.f32 %v245, %v248
  %v313 = vperm.slane %v79, 0
  %v315 = vmul.f32 %v180, %v313
  %v316 = vmul.f32 %v183, %v313
  %v318 = vsel %vm86, %v315, 0
  %v321 = vsel %vm86, %v316, 0
  %323 = vmatpush.xpose.msra.mxu0 0.0
  %324 = vmatpush.xpose.msra.mxu0 0.0
  %325 = vmatpush.xpose.msra.mxu0 0.0
  %326 = vmatpush.xpose.msra.mxu0 0.0
  %327 = vmatpush.xpose.msra.mxu0 0.0
  %328 = vmatpush.xpose.msra.mxu0 0.0
  %329 = vmatpush.xpose.msra.mxu0 0.0
  %330 = vmatpush.xpose.msra.mxu0 0.0
  %331 = vmatpush.xpose.msra.mxu0 0.0
  %332 = vmatpush.xpose.msra.mxu0 0.0
  %333 = vmatpush.xpose.msra.mxu0 0.0
  %334 = vmatpush.xpose.msra.mxu0 0.0
  %335 = vmatpush.xpose.msra.mxu0 0.0
  %336 = vmatpush.xpose.msra.mxu0 0.0
  %337 = vmatpush.xpose.msra.mxu0 %v262
  %338 = vmatpush.xpose.msra.mxu0 %v259
  %339 = vmatmul.f32.gmra.mxu0 %v318
  %v340 = vpop.f32.mrf.mxu0
  %v341 = vadd.f32 %v76, %v340
  %342 = vmatmul.f32.gmra.mxu0 %v321
  %v343 = vpop.f32.mrf.mxu0
  %v344 = vadd.f32 %v77, %v343
  %345 = vdwg.mxu0
  %v346 = vsel %vm287, %v341, -inf
  %347 = vmax.xlane.f32.xlu0 %v346
  %v348 = vpop.xlane.xlu0 %347
  %v349 = vsel %vm287, %v344, -inf
  %350 = vmax.xlane.f32.xlu0 %v349
  %v351 = vpop.xlane.xlu0 %350
  %v352 = vsub.f32 %v341, %v348
  %v353 = vsub.f32 %v344, %v351
  %v354 = vmul.f32 %v352, 1.442695
  %v355 = vpow.pop %v354
  %v356 = vmul.f32 %v353, 1.442695
  %v357 = vpow.pop %v356
  %v358 = vsel %vm287, %v355, 0.0
  %359 = vadd.xlane.f32.xlu0 %v358
  %v360 = vpop.xlane.xlu0 %359
  %v361 = vsel %vm287, %v357, 0.0
  %362 = vadd.xlane.f32.xlu0 %v361
  %v363 = vpop.xlane.xlu0 %362
  %v364 = vrcp.pop %v360
  %v365 = vrcp.pop %v363
  %v366 = vmul.f32 %v355, %v364
  %v367 = vmul.f32 %v357, %v365
  %v368 = vmul.f32 %v242, %v313
  %v369 = vmul.f32 %v245, %v313
  %v371 = vsel %vm287, %v366, 0
  %v374 = vsel %vm287, %v367, 0
  %376 = vmatpush.msra.mxu0 0.0
  %377 = vmatpush.msra.mxu0 0.0
  %378 = vmatpush.msra.mxu0 0.0
  %379 = vmatpush.msra.mxu0 0.0
  %380 = vmatpush.msra.mxu0 0.0
  %381 = vmatpush.msra.mxu0 0.0
  %382 = vmatpush.msra.mxu0 0.0
  %383 = vmatpush.msra.mxu0 0.0
  %384 = vmatpush.msra.mxu0 0.0
  %385 = vmatpush.msra.mxu0 0.0
  %386 = vmatpush.msra.mxu0 0.0
  %387 = vmatpush.msra.mxu0 0.0
  %388 = vmatpush.msra.mxu0 0.0
  %389 = vmatpush.msra.mxu0 0.0
  %390 = vmatpush.msra.mxu0 %v369
  %391 = vmatpush.msra.mxu0 %v368
  %392 = vmatmul.f32.gmra.mxu0 %v371
  %v393 = vpop.f32.mrf.mxu0
  %v394 = vadd.f32 0.0, %v393
  %395 = vmatmul.f32.gmra.mxu0 %v374
  %v396 = vpop.f32.mrf.mxu0
  %v397 = vadd.f32 0.0, %v396
  %398 = vdwg.mxu0
  %v400 = vsel %vm287, %v308, 0
  %v403 = vsel %vm287, %v309, 0
  %405 = vmatpush.msra.mxu0 0.0
  %406 = vmatpush.msra.mxu0 0.0
  %407 = vmatpush.msra.mxu0 0.0
  %408 = vmatpush.msra.mxu0 0.0
  %409 = vmatpush.msra.mxu0 0.0
  %410 = vmatpush.msra.mxu0 0.0
  %411 = vmatpush.msra.mxu0 0.0
  %412 = vmatpush.msra.mxu0 0.0
  %413 = vmatpush.msra.mxu0 0.0
  %414 = vmatpush.msra.mxu0 0.0
  %415 = vmatpush.msra.mxu0 0.0
  %416 = vmatpush.msra.mxu0 0.0
  %417 = vmatpush.msra.mxu0 0.0
  %418 = vmatpush.msra.mxu0 0.0
  %419 = vmatpush.msra.mxu0 %v311
  %420 = vmatpush.msra.mxu0 %v310
  %421 = vmatmul.f32.gmra.mxu0 %v400
  %v422 = vpop.f32.mrf.mxu0
  %v423 = vadd.f32 %v394, %v422
  %424 = vmatmul.f32.gmra.mxu0 %v403
  %v425 = vpop.f32.mrf.mxu0
  %v426 = vadd.f32 %v397, %v425
  %427 = vdwg.mxu0
  %v429 = vperm.slane %v80, 0
  %v431 = vmul.f32 %v180, %v429
  %v432 = vmul.f32 %v183, %v429
  %v434 = vsel %vm86, %v431, 0
  %v437 = vsel %vm86, %v432, 0
  %439 = vmatpush.xpose.msra.mxu0 0.0
  %440 = vmatpush.xpose.msra.mxu0 0.0
  %441 = vmatpush.xpose.msra.mxu0 0.0
  %442 = vmatpush.xpose.msra.mxu0 0.0
  %443 = vmatpush.xpose.msra.mxu0 0.0
  %444 = vmatpush.xpose.msra.mxu0 0.0
  %445 = vmatpush.xpose.msra.mxu0 0.0
  %446 = vmatpush.xpose.msra.mxu0 0.0
  %447 = vmatpush.xpose.msra.mxu0 0.0
  %448 = vmatpush.xpose.msra.mxu0 0.0
  %449 = vmatpush.xpose.msra.mxu0 0.0
  %450 = vmatpush.xpose.msra.mxu0 0.0
  %451 = vmatpush.xpose.msra.mxu0 0.0
  %452 = vmatpush.xpose.msra.mxu0 0.0
  %453 = vmatpush.xpose.msra.mxu0 %v262
  %454 = vmatpush.xpose.msra.mxu0 %v259
  %455 = vmatmul.f32.gmra.mxu0 %v434
  %v456 = vpop.f32.mrf.mxu0
  %v457 = vadd.f32 %v76, %v456
  %458 = vmatmul.f32.gmra.mxu0 %v437
  %v459 = vpop.f32.mrf.mxu0
  %v460 = vadd.f32 %v77, %v459
  %461 = vdwg.mxu0
  %v462 = vsel %vm287, %v457, -inf
  %463 = vmax.xlane.f32.xlu0 %v462
  %v464 = vpop.xlane.xlu0 %463
  %v465 = vsel %vm287, %v460, -inf
  %466 = vmax.xlane.f32.xlu0 %v465
  %v467 = vpop.xlane.xlu0 %466
  %v468 = vsub.f32 %v457, %v464
  %v469 = vsub.f32 %v460, %v467
  %v470 = vmul.f32 %v468, 1.442695
  %v471 = vpow.pop %v470
  %v472 = vmul.f32 %v469, 1.442695
  %v473 = vpow.pop %v472
  %v474 = vsel %vm287, %v471, 0.0
  %475 = vadd.xlane.f32.xlu0 %v474
  %v476 = vpop.xlane.xlu0 %475
  %v477 = vsel %vm287, %v473, 0.0
  %478 = vadd.xlane.f32.xlu0 %v477
  %v479 = vpop.xlane.xlu0 %478
  %v480 = vrcp.pop %v476
  %v481 = vrcp.pop %v479
  %v482 = vmul.f32 %v471, %v480
  %v483 = vmul.f32 %v473, %v481
  %v484 = vmul.f32 %v242, %v429
  %v485 = vmul.f32 %v245, %v429
  %v487 = vsel %vm287, %v482, 0
  %v490 = vsel %vm287, %v483, 0
  %492 = vmatpush.msra.mxu0 0.0
  %493 = vmatpush.msra.mxu0 0.0
  %494 = vmatpush.msra.mxu0 0.0
  %495 = vmatpush.msra.mxu0 0.0
  %496 = vmatpush.msra.mxu0 0.0
  %497 = vmatpush.msra.mxu0 0.0
  %498 = vmatpush.msra.mxu0 0.0
  %499 = vmatpush.msra.mxu0 0.0
  %500 = vmatpush.msra.mxu0 0.0
  %501 = vmatpush.msra.mxu0 0.0
  %502 = vmatpush.msra.mxu0 0.0
  %503 = vmatpush.msra.mxu0 0.0
  %504 = vmatpush.msra.mxu0 0.0
  %505 = vmatpush.msra.mxu0 0.0
  %506 = vmatpush.msra.mxu0 %v485
  %507 = vmatpush.msra.mxu0 %v484
  %508 = vmatmul.f32.gmra.mxu0 %v487
  %v509 = vpop.f32.mrf.mxu0
  %v510 = vadd.f32 0.0, %v509
  %511 = vmatmul.f32.gmra.mxu0 %v490
  %v512 = vpop.f32.mrf.mxu0
  %v513 = vadd.f32 0.0, %v512
  %514 = vdwg.mxu0
  %v515 = vadd.f32 %v423, %v510
  %v516 = vadd.f32 %v426, %v513
  %v518 = vperm.slane %v81, 0
  %v520 = vmul.f32 %v180, %v518
  %v521 = vmul.f32 %v183, %v518
  %v523 = vsel %vm86, %v520, 0
  %v526 = vsel %vm86, %v521, 0
  %528 = vmatpush.xpose.msra.mxu0 0.0
  %529 = vmatpush.xpose.msra.mxu0 0.0
  %530 = vmatpush.xpose.msra.mxu0 0.0
  %531 = vmatpush.xpose.msra.mxu0 0.0
  %532 = vmatpush.xpose.msra.mxu0 0.0
  %533 = vmatpush.xpose.msra.mxu0 0.0
  %534 = vmatpush.xpose.msra.mxu0 0.0
  %535 = vmatpush.xpose.msra.mxu0 0.0
  %536 = vmatpush.xpose.msra.mxu0 0.0
  %537 = vmatpush.xpose.msra.mxu0 0.0
  %538 = vmatpush.xpose.msra.mxu0 0.0
  %539 = vmatpush.xpose.msra.mxu0 0.0
  %540 = vmatpush.xpose.msra.mxu0 0.0
  %541 = vmatpush.xpose.msra.mxu0 0.0
  %542 = vmatpush.xpose.msra.mxu0 %v262
  %543 = vmatpush.xpose.msra.mxu0 %v259
  %544 = vmatmul.f32.gmra.mxu0 %v523
  %v545 = vpop.f32.mrf.mxu0
  %v546 = vadd.f32 %v76, %v545
  %547 = vmatmul.f32.gmra.mxu0 %v526
  %v548 = vpop.f32.mrf.mxu0
  %v549 = vadd.f32 %v77, %v548
  %550 = vdwg.mxu0
  %v551 = vsel %vm287, %v546, -inf
  %552 = vmax.xlane.f32.xlu0 %v551
  %v553 = vpop.xlane.xlu0 %552
  %v554 = vsel %vm287, %v549, -inf
  %555 = vmax.xlane.f32.xlu0 %v554
  %v556 = vpop.xlane.xlu0 %555
  %v557 = vsub.f32 %v546, %v553
  %v558 = vsub.f32 %v549, %v556
  %v559 = vmul.f32 %v557, 1.442695
  %v560 = vpow.pop %v559
  %v561 = vmul.f32 %v558, 1.442695
  %v562 = vpow.pop %v561
  %v563 = vsel %vm287, %v560, 0.0
  %564 = vadd.xlane.f32.xlu0 %v563
  %v565 = vpop.xlane.xlu0 %564
  %v566 = vsel %vm287, %v562, 0.0
  %567 = vadd.xlane.f32.xlu0 %v566
  %v568 = vpop.xlane.xlu0 %567
  %v569 = vrcp.pop %v565
  %v570 = vrcp.pop %v568
  %v571 = vmul.f32 %v560, %v569
  %v572 = vmul.f32 %v562, %v570
  %v573 = vmul.f32 %v242, %v518
  %v574 = vmul.f32 %v245, %v518
  %v576 = vsel %vm287, %v571, 0
  %v579 = vsel %vm287, %v572, 0
  %581 = vmatpush.msra.mxu0 0.0
  %582 = vmatpush.msra.mxu0 0.0
  %583 = vmatpush.msra.mxu0 0.0
  %584 = vmatpush.msra.mxu0 0.0
  %585 = vmatpush.msra.mxu0 0.0
  %586 = vmatpush.msra.mxu0 0.0
  %587 = vmatpush.msra.mxu0 0.0
  %588 = vmatpush.msra.mxu0 0.0
  %589 = vmatpush.msra.mxu0 0.0
  %590 = vmatpush.msra.mxu0 0.0
  %591 = vmatpush.msra.mxu0 0.0
  %592 = vmatpush.msra.mxu0 0.0
  %593 = vmatpush.msra.mxu0 0.0
  %594 = vmatpush.msra.mxu0 0.0
  %595 = vmatpush.msra.mxu0 %v574
  %596 = vmatpush.msra.mxu0 %v573
  %597 = vmatmul.f32.gmra.mxu0 %v576
  %v598 = vpop.f32.mrf.mxu0
  %v599 = vadd.f32 0.0, %v598
  %600 = vmatmul.f32.gmra.mxu0 %v579
  %v601 = vpop.f32.mrf.mxu0
  %v602 = vadd.f32 0.0, %v601
  %603 = vdwg.mxu0
  %v604 = vadd.f32 %v515, %v599
  %v605 = vadd.f32 %v516, %v602
  %v606 = vld [vmem:[%s11] sm:$0xff]
  %v607 = vld [vmem:[%s11 + $0x8] sm:$0xff]
  %v608 = vld [vmem:[%s11 + $0x10] sm:$0xff]
  %v609 = vld [vmem:[%s11 + $0x18] sm:$0xff]
  %v610 = vld [vmem:[%s12] sm:$0x1]
  %v612 = vperm.slane %v610, 0
  %v615 = vsel %vm86, %v604, 0
  %v618 = vsel %vm86, %v605, 0
  %620 = vmatpush.msra.mxu0 0.0
  %621 = vmatpush.msra.mxu0 0.0
  %622 = vmatpush.msra.mxu0 0.0
  %623 = vmatpush.msra.mxu0 0.0
  %624 = vmatpush.msra.mxu0 0.0
  %625 = vmatpush.msra.mxu0 0.0
  %626 = vmatpush.msra.mxu0 0.0
  %627 = vmatpush.msra.mxu0 0.0
  %628 = vmatpush.msra.mxu0 0.0
  %629 = vmatpush.msra.mxu0 0.0
  %630 = vmatpush.msra.mxu0 0.0
  %631 = vmatpush.msra.mxu0 0.0
  %632 = vmatpush.msra.mxu0 %v609
  %633 = vmatpush.msra.mxu0 %v608
  %634 = vmatpush.msra.mxu0 %v607
  %635 = vmatpush.msra.mxu0 %v606
  %636 = vmatmul.f32.gmra.mxu0 %v615
  %v637 = vpop.f32.mrf.mxu0
  %v638 = vadd.f32 %v612, %v637
  %639 = vmatmul.f32.gmra.mxu0 %v618
  %v640 = vpop.f32.mrf.mxu0
  %v641 = vadd.f32 %v612, %v640
  %642 = vdwg.mxu0
  %v643 = vadd.f32 %v638, %v146
  %v644 = vadd.f32 %v641, %v147
  %v645 = vld [vmem:[%s13] sm:$0x1]
  %v646 = vld [vmem:[%s14] sm:$0x1]
  %v647 = vsel %vm86, %v643, 0.0
  %648 = vadd.xlane.f32.xlu0 %v647
  %v649 = vpop.xlane.xlu0 %648
  %v650 = vsel %vm86, %v644, 0.0
  %651 = vadd.xlane.f32.xlu0 %v650
  %v652 = vpop.xlane.xlu0 %651
  %v653 = vmul.f32 %v649, %v99
  %v654 = vmul.f32 %v652, %v99
  %v655 = vsub.f32 %v643, %v653
  %v656 = vsub.f32 %v644, %v654
  %v657 = vmul.f32 %v655, %v655
  %v658 = vmul.f32 %v656, %v656
  %v659 = vsel %vm86, %v657, 0.0
  %660 = vadd.xlane.f32.xlu0 %v659
  %v661 = vpop.xlane.xlu0 %660
  %v662 = vsel %vm86, %v658, 0.0
  %663 = vadd.xlane.f32.xlu0 %v662
  %v664 = vpop.xlane.xlu0 %663
  %v665 = vmul.f32 %v661, %v99
  %v666 = vmul.f32 %v664, %v99
  %v667 = vadd.f32 %v665, 1e-12
  %v668 = vadd.f32 %v666, 1e-12
  %v669 = vrsqrt.pop %v667
  %v670 = vmul.f32 %v669, %v667
  %v671 = vmul.f32 %v670, %v669
  %v672 = vmul.f32 0.5, %v671
  %v673 = vsub.f32 1.5, %v672
  %v674 = vmul.f32 %v669, %v673
  %vm675 = vweird.f32 %v667
  %vm676 = vweird.f32 %v669
  %vm677 = vmor %vm675, %vm676
  %v678 = vsel %vm677, %v669, %v674
  %v679 = vrsqrt.pop %v668
  %v680 = vmul.f32 %v679, %v668
  %v681 = vmul.f32 %v680, %v679
  %v682 = vmul.f32 0.5, %v681
  %v683 = vsub.f32 1.5, %v682
  %v684 = vmul.f32 %v679, %v683
  %vm685 = vweird.f32 %v668
  %vm686 = vweird.f32 %v679
  %vm687 = vmor %vm685, %vm686
  %v688 = vsel %vm687, %v679, %v684
  %v689 = vmul.f32 %v655, %v678
  %v690 = vmul.f32 %v656, %v688
  %v692 = vperm.slane %v645, 0
  %v694 = vmul.f32 %v689, %v692
  %v695 = vmul.f32 %v690, %v692
  %v697 = vperm.slane %v646, 0
  %v699 = vadd.f32 %v694, %v697
  %v700 = vadd.f32 %v695, %v697
  %v701 = vld [vmem:[%s15] sm:$0xff]
  %v702 = vld [vmem:[%s15 + $0x8] sm:$0xff]
  %v703 = vld [vmem:[%s15 + $0x10] sm:$0xff]
  %v704 = vld [vmem:[%s15 + $0x18] sm:$0xff]
  %v705 = vld [vmem:[%s16] sm:$0x1]
  %v707 = vperm.slane %v705, 0
  %v710 = vsel %vm86, %v699, 0
  %v713 = vsel %vm86, %v700, 0
  %715 = vmatpush.msra.mxu0 0.0
  %716 = vmatpush.msra.mxu0 0.0
  %717 = vmatpush.msra.mxu0 0.0
  %718 = vmatpush.msra.mxu0 0.0
  %719 = vmatpush.msra.mxu0 0.0
  %720 = vmatpush.msra.mxu0 0.0
  %721 = vmatpush.msra.mxu0 0.0
  %722 = vmatpush.msra.mxu0 0.0
  %723 = vmatpush.msra.mxu0 0.0
  %724 = vmatpush.msra.mxu0 0.0
  %725 = vmatpush.msra.mxu0 0.0
  %726 = vmatpush.msra.mxu0 0.0
  %727 = vmatpush.msra.mxu0 %v704
  %728 = vmatpush.msra.mxu0 %v703
  %729 = vmatpush.msra.mxu0 %v702
  %730 = vmatpush.msra.mxu0 %v701
  %731 = vmatmul.f32.gmra.mxu0 %v710
  %v732 = vpop.f32.mrf.mxu0
  %v733 = vadd.f32 %v707, %v732
  %734 = vmatmul.f32.gmra.mxu0 %v713
  %v735 = vpop.f32.mrf.mxu0
  %v736 = vadd.f32 %v707, %v735
  %737 = vdwg.mxu0
  %v738 = vmul.f32 %v733, 0.5
  %v739 = vmul.f32 %v736, 0.5
  %v740 = vmul.f32 %v733, 0.044715
  %v741 = vmul.f32 %v736, 0.044715
  %v742 = vmul.f32 %v740, %v733
  %v743 = vmul.f32 %v741, %v736
  %v744 = vmul.f32 %v742, %v733
  %v745 = vmul.f32 %v743, %v736
  %v746 = vadd.f32 %v733, %v744
  %v747 = vadd.f32 %v736, %v745
  %v748 = vmul.f32 %v746, 0.7978846
  %v749 = vmul.f32 %v747, 0.7978846
  %v750 = vtanh.pop %v748
  %v751 = vtanh.pop %v749
  %v752 = vadd.f32 %v750, 1.0
  %v753 = vadd.f32 %v751, 1.0
  %v754 = vmul.f32 %v738, %v752
  %v755 = vmul.f32 %v739, %v753
  %v756 = vld [vmem:[%s17] sm:$0xff]
  %v757 = vld [vmem:[%s17 + $0x8] sm:$0xff]
  %v758 = vld [vmem:[%s17 + $0x10] sm:$0xff]
  %v759 = vld [vmem:[%s17 + $0x18] sm:$0xff]
  %v760 = vld [vmem:[%s17 + $0x20] sm:$0xff]
  %v761 = vld [vmem:[%s17 + $0x28] sm:$0xff]
  %v762 = vld [vmem:[%s17 + $0x30] sm:$0xff]
  %v763 = vld [vmem:[%s17 + $0x38] sm:$0xff]
  %v764 = vld [vmem:[%s18] sm:$0x1]
  %v766 = vperm.slane %v764, 0
  %vm768 = vcmask 523264
  %v770 = vsel %vm768, %v754, 0
  %v773 = vsel %vm768, %v755, 0
  %775 = vmatpush.msra.mxu0 0.0
  %776 = vmatpush.msra.mxu0 0.0
  %777 = vmatpush.msra.mxu0 0.0
  %778 = vmatpush.msra.mxu0 0.0
  %779 = vmatpush.msra.mxu0 0.0
  %780 = vmatpush.msra.mxu0 0.0
  %781 = vmatpush.msra.mxu0 0.0
  %782 = vmatpush.msra.mxu0 0.0
  %783 = vmatpush.msra.mxu0 %v763
  %784 = vmatpush.msra.mxu0 %v762
  %785 = vmatpush.msra.mxu0 %v761
  %786 = vmatpush.msra.mxu0 %v760
  %787 = vmatpush.msra.mxu0 %v759
  %788 = vmatpush.msra.mxu0 %v758
  %789 = vmatpush.msra.mxu0 %v757
  %790 = vmatpush.msra.mxu0 %v756
  %791 = vmatmul.f32.gmra.mxu0 %v770
  %v792 = vpop.f32.mrf.mxu0
  %v793 = vadd.f32 %v766, %v792
  %794 = vmatmul.f32.gmra.mxu0 %v773
  %v795 = vpop.f32.mrf.mxu0
  %v796 = vadd.f32 %v766, %v795
  %797 = vdwg.mxu0
  %v798 = vadd.f32 %v793, %v699
  %v799 = vadd.f32 %v796, %v700
  %v800 = vld [vmem:[%s19] sm:$0x1]
  %v801 = vld [vmem:[%s20] sm:$0x1]
  %v802 = vsel %vm86, %v798, 0.0
  %803 = vadd.xlane.f32.xlu0 %v802
  %v804 = vpop.xlane.xlu0 %803
  %v805 = vsel %vm86, %v799, 0.0
  %806 = vadd.xlane.f32.xlu0 %v805
  %v807 = vpop.xlane.xlu0 %806
  %v808 = vmul.f32 %v804, %v99
  %v809 = vmul.f32 %v807, %v99
  %v810 = vsub.f32 %v798, %v808
  %v811 = vsub.f32 %v799, %v809
  %v812 = vmul.f32 %v810, %v810
  %v813 = vmul.f32 %v811, %v811
  %v814 = vsel %vm86, %v812, 0.0
  %815 = vadd.xlane.f32.xlu0 %v814
  %v816 = vpop.xlane.xlu0 %815
  %v817 = vsel %vm86, %v813, 0.0
  %818 = vadd.xlane.f32.xlu0 %v817
  %v819 = vpop.xlane.xlu0 %818
  %v820 = vmul.f32 %v816, %v99
  %v821 = vmul.f32 %v819, %v99
  %v822 = vadd.f32 %v820, 1e-12
  %v823 = vadd.f32 %v821, 1e-12
  %v824 = vrsqrt.pop %v822
  %v825 = vmul.f32 %v824, %v822
  %v826 = vmul.f32 %v825, %v824
  %v827 = vmul.f32 0.5, %v826
  %v828 = vsub.f32 1.5, %v827
  %v829 = vmul.f32 %v824, %v828
  %vm830 = vweird.f32 %v822
  %vm831 = vweird.f32 %v824
  %vm832 = vmor %vm830, %vm831
  %v833 = vsel %vm832, %v824, %v829
  %v834 = vrsqrt.pop %v823
  %v835 = vmul.f32 %v834, %v823
  %v836 = vmul.f32 %v835, %v834
  %v837 = vmul.f32 0.5, %v836
  %v838 = vsub.f32 1.5, %v837
  %v839 = vmul.f32 %v834, %v838
  %vm840 = vweird.f32 %v823
  %vm841 = vweird.f32 %v834
  %vm842 = vmor %vm840, %vm841
  %v843 = vsel %vm842, %v834, %v839
  %v844 = vmul.f32 %v810, %v833
  %v845 = vmul.f32 %v811, %v843
  %v847 = vperm.slane %v800, 0
  %v849 = vmul.f32 %v844, %v847
  %v850 = vmul.f32 %v845, %v847
  %v852 = vperm.slane %v801, 0
  %v854 = vadd.f32 %v849, %v852
  %v855 = vadd.f32 %v850, %v852
  %s856 = scalar_lea.vmem %s5, 32
  %v857 = vld [vmem:[%s856] sm:$0xff]
  %v858 = vld [vmem:[%s856 + $0x8] sm:$0xff]
  %v859 = vld [vmem:[%s856 + $0x10] sm:$0xff]
  %v860 = vld [vmem:[%s856 + $0x18] sm:$0xff]
  %s861 = scalar_lea.vmem %s6, 1
  %v862 = vld [vmem:[%s861] sm:$0x1]
  %v864 = vperm.slane %v862, 0
  %v867 = vsel %vm86, %v854, 0
  %v870 = vsel %vm86, %v855, 0
  %872 = vmatpush.msra.mxu0 0.0
  %873 = vmatpush.msra.mxu0 0.0
  %874 = vmatpush.msra.mxu0 0.0
  %875 = vmatpush.msra.mxu0 0.0
  %876 = vmatpush.msra.mxu0 0.0
  %877 = vmatpush.msra.mxu0 0.0
  %878 = vmatpush.msra.mxu0 0.0
  %879 = vmatpush.msra.mxu0 0.0
  %880 = vmatpush.msra.mxu0 0.0
  %881 = vmatpush.msra.mxu0 0.0
  %882 = vmatpush.msra.mxu0 0.0
  %883 = vmatpush.msra.mxu0 0.0
  %884 = vmatpush.msra.mxu0 %v860
  %885 = vmatpush.msra.mxu0 %v859
  %886 = vmatpush.msra.mxu0 %v858
  %887 = vmatpush.msra.mxu0 %v857
  %888 = vmatmul.f32.gmra.mxu0 %v867
  %v889 = vpop.f32.mrf.mxu0
  %v890 = vadd.f32 %v864, %v889
  %891 = vmatmul.f32.gmra.mxu0 %v870
  %v892 = vpop.f32.mrf.mxu0
  %v893 = vadd.f32 %v864, %v892
  %894 = vdwg.mxu0
  %s895 = scalar_lea.vmem %s7, 32
  %v896 = vld [vmem:[%s895] sm:$0xff]
  %v897 = vld [vmem:[%s895 + $0x8] sm:$0xff]
  %v898 = vld [vmem:[%s895 + $0x10] sm:$0xff]
  %v899 = vld [vmem:[%s895 + $0x18] sm:$0xff]
  %s900 = scalar_lea.vmem %s8, 1
  %v901 = vld [vmem:[%s900] sm:$0x1]
  %v903 = vperm.slane %v901, 0
  %905 = vmatpush.msra.mxu0 0.0
  %906 = vmatpush.msra.mxu0 0.0
  %907 = vmatpush.msra.mxu0 0.0
  %908 = vmatpush.msra.mxu0 0.0
  %909 = vmatpush.msra.mxu0 0.0
  %910 = vmatpush.msra.mxu0 0.0
  %911 = vmatpush.msra.mxu0 0.0
  %912 = vmatpush.msra.mxu0 0.0
  %913 = vmatpush.msra.mxu0 0.0
  %914 = vmatpush.msra.mxu0 0.0
  %915 = vmatpush.msra.mxu0 0.0
  %916 = vmatpush.msra.mxu0 0.0
  %917 = vmatpush.msra.mxu0 %v899
  %918 = vmatpush.msra.mxu0 %v898
  %919 = vmatpush.msra.mxu0 %v897
  %920 = vmatpush.msra.mxu0 %v896
  %921 = vmatmul.f32.gmra.mxu0 %v867
  %v922 = vpop.f32.mrf.mxu0
  %v923 = vadd.f32 %v903, %v922
  %924 = vmatmul.f32.gmra.mxu0 %v870
  %v925 = vpop.f32.mrf.mxu0
  %v926 = vadd.f32 %v903, %v925
  %927 = vdwg.mxu0
  %s928 = scalar_lea.vmem %s9, 32
  %v929 = vld [vmem:[%s928] sm:$0xff]
  %v930 = vld [vmem:[%s928 + $0x8] sm:$0xff]
  %v931 = vld [vmem:[%s928 + $0x10] sm:$0xff]
  %v932 = vld [vmem:[%s928 + $0x18] sm:$0xff]
  %s933 = scalar_lea.vmem %s10, 1
  %v934 = vld [vmem:[%s933] sm:$0x1]
  %v936 = vperm.slane %v934, 0
  %938 = vmatpush.msra.mxu0 0.0
  %939 = vmatpush.msra.mxu0 0.0
  %940 = vmatpush.msra.mxu0 0.0
  %941 = vmatpush.msra.mxu0 0.0
  %942 = vmatpush.msra.mxu0 0.0
  %943 = vmatpush.msra.mxu0 0.0
  %944 = vmatpush.msra.mxu0 0.0
  %945 = vmatpush.msra.mxu0 0.0
  %946 = vmatpush.msra.mxu0 0.0
  %947 = vmatpush.msra.mxu0 0.0
  %948 = vmatpush.msra.mxu0 0.0
  %949 = vmatpush.msra.mxu0 0.0
  %950 = vmatpush.msra.mxu0 %v932
  %951 = vmatpush.msra.mxu0 %v931
  %952 = vmatpush.msra.mxu0 %v930
  %953 = vmatpush.msra.mxu0 %v929
  %954 = vmatmul.f32.gmra.mxu0 %v867
  %v955 = vpop.f32.mrf.mxu0
  %v956 = vadd.f32 %v936, %v955
  %957 = vmatmul.f32.gmra.mxu0 %v870
  %v958 = vpop.f32.mrf.mxu0
  %v959 = vadd.f32 %v936, %v958
  %960 = vdwg.mxu0
  %v961 = vmul.f32 %v890, %v248
  %v962 = vmul.f32 %v893, %v248
  %v964 = vsel %vm86, %v961, 0
  %v967 = vsel %vm86, %v962, 0
  %v970 = vsel %vm86, %v923, 0
  %v973 = vsel %vm86, %v926, 0
  %975 = vmatpush.xpose.msra.mxu0 0.0
  %976 = vmatpush.xpose.msra.mxu0 0.0
  %977 = vmatpush.xpose.msra.mxu0 0.0
  %978 = vmatpush.xpose.msra.mxu0 0.0
  %979 = vmatpush.xpose.msra.mxu0 0.0
  %980 = vmatpush.xpose.msra.mxu0 0.0
  %981 = vmatpush.xpose.msra.mxu0 0.0
  %982 = vmatpush.xpose.msra.mxu0 0.0
  %983 = vmatpush.xpose.msra.mxu0 0.0
  %984 = vmatpush.xpose.msra.mxu0 0.0
  %985 = vmatpush.xpose.msra.mxu0 0.0
  %986 = vmatpush.xpose.msra.mxu0 0.0
  %987 = vmatpush.xpose.msra.mxu0 0.0
  %988 = vmatpush.xpose.msra.mxu0 0.0
  %989 = vmatpush.xpose.msra.mxu0 %v973
  %990 = vmatpush.xpose.msra.mxu0 %v970
  %991 = vmatmul.f32.gmra.mxu0 %v964
  %v992 = vpop.f32.mrf.mxu0
  %v993 = vadd.f32 %v76, %v992
  %994 = vmatmul.f32.gmra.mxu0 %v967
  %v995 = vpop.f32.mrf.mxu0
  %v996 = vadd.f32 %v77, %v995
  %997 = vdwg.mxu0
  %v998 = vsel %vm287, %v993, -inf
  %999 = vmax.xlane.f32.xlu0 %v998
  %v1000 = vpop.xlane.xlu0 %999
  %v1001 = vsel %vm287, %v996, -inf
  %1002 = vmax.xlane.f32.xlu0 %v1001
  %v1003 = vpop.xlane.xlu0 %1002
  %v1004 = vsub.f32 %v993, %v1000
  %v1005 = vsub.f32 %v996, %v1003
  %v1006 = vmul.f32 %v1004, 1.442695
  %v1007 = vpow.pop %v1006
  %v1008 = vmul.f32 %v1005, 1.442695
  %v1009 = vpow.pop %v1008
  %v1010 = vsel %vm287, %v1007, 0.0
  %1011 = vadd.xlane.f32.xlu0 %v1010
  %v1012 = vpop.xlane.xlu0 %1011
  %v1013 = vsel %vm287, %v1009, 0.0
  %1014 = vadd.xlane.f32.xlu0 %v1013
  %v1015 = vpop.xlane.xlu0 %1014
  %v1016 = vrcp.pop %v1012
  %v1017 = vrcp.pop %v1015
  %v1018 = vmul.f32 %v1007, %v1016
  %v1019 = vmul.f32 %v1009, %v1017
  %v1020 = vmul.f32 %v956, %v248
  %v1021 = vmul.f32 %v959, %v248
  %v1022 = vmul.f32 %v890, %v313
  %v1023 = vmul.f32 %v893, %v313
  %v1025 = vsel %vm86, %v1022, 0
  %v1028 = vsel %vm86, %v1023, 0
  %1030 = vmatpush.xpose.msra.mxu0 0.0
  %1031 = vmatpush.xpose.msra.mxu0 0.0
  %1032 = vmatpush.xpose.msra.mxu0 0.0
  %1033 = vmatpush.xpose.msra.mxu0 0.0
  %1034 = vmatpush.xpose.msra.mxu0 0.0
  %1035 = vmatpush.xpose.msra.mxu0 0.0
  %1036 = vmatpush.xpose.msra.mxu0 0.0
  %1037 = vmatpush.xpose.msra.mxu0 0.0
  %1038 = vmatpush.xpose.msra.mxu0 0.0
  %1039 = vmatpush.xpose.msra.mxu0 0.0
  %1040 = vmatpush.xpose.msra.mxu0 0.0
  %1041 = vmatpush.xpose.msra.mxu0 0.0
  %1042 = vmatpush.xpose.msra.mxu0 0.0
  %1043 = vmatpush.xpose.msra.mxu0 0.0
  %1044 = vmatpush.xpose.msra.mxu0 %v973
  %1045 = vmatpush.xpose.msra.mxu0 %v970
  %1046 = vmatmul.f32.gmra.mxu0 %v1025
  %v1047 = vpop.f32.mrf.mxu0
  %v1048 = vadd.f32 %v76, %v1047
  %1049 = vmatmul.f32.gmra.mxu0 %v1028
  %v1050 = vpop.f32.mrf.mxu0
  %v1051 = vadd.f32 %v77, %v1050
  %1052 = vdwg.mxu0
  %v1053 = vsel %vm287, %v1048, -inf
  %1054 = vmax.xlane.f32.xlu0 %v1053
  %v1055 = vpop.xlane.xlu0 %1054
  %v1056 = vsel %vm287, %v1051, -inf
  %1057 = vmax.xlane.f32.xlu0 %v1056
  %v1058 = vpop.xlane.xlu0 %1057
  %v1059 = vsub.f32 %v1048, %v1055
  %v1060 = vsub.f32 %v1051, %v1058
  %v1061 = vmul.f32 %v1059, 1.442695
  %v1062 = vpow.pop %v1061
  %v1063 = vmul.f32 %v1060, 1.442695
  %v1064 = vpow.pop %v1063
  %v1065 = vsel %vm287, %v1062, 0.0
  %1066 = vadd.xlane.f32.xlu0 %v1065
  %v1067 = vpop.xlane.xlu0 %1066
  %v1068 = vsel %vm287, %v1064, 0.0
  %1069 = vadd.xlane.f32.xlu0 %v1068
  %v1070 = vpop.xlane.xlu0 %1069
  %v1071 = vrcp.pop %v1067
  %v1072 = vrcp.pop %v1070
  %v1073 = vmul.f32 %v1062, %v1071
  %v1074 = vmul.f32 %v1064, %v1072
  %v1075 = vmul.f32 %v956, %v313
  %v1076 = vmul.f32 %v959, %v313
  %v1078 = vsel %vm287, %v1073, 0
  %v1081 = vsel %vm287, %v1074, 0
  %1083 = vmatpush.msra.mxu0 0.0
  %1084 = vmatpush.msra.mxu0 0.0
  %1085 = vmatpush.msra.mxu0 0.0
  %1086 = vmatpush.msra.mxu0 0.0
  %1087 = vmatpush.msra.mxu0 0.0
  %1088 = vmatpush.msra.mxu0 0.0
  %1089 = vmatpush.msra.mxu0 0.0
  %1090 = vmatpush.msra.mxu0 0.0
  %1091 = vmatpush.msra.mxu0 0.0
  %1092 = vmatpush.msra.mxu0 0.0
  %1093 = vmatpush.msra.mxu0 0.0
  %1094 = vmatpush.msra.mxu0 0.0
  %1095 = vmatpush.msra.mxu0 0.0
  %1096 = vmatpush.msra.mxu0 0.0
  %1097 = vmatpush.msra.mxu0 %v1076
  %1098 = vmatpush.msra.mxu0 %v1075
  %1099 = vmatmul.f32.gmra.mxu0 %v1078
  %v1100 = vpop.f32.mrf.mxu0
  %v1101 = vadd.f32 0.0, %v1100
  %1102 = vmatmul.f32.gmra.mxu0 %v1081
  %v1103 = vpop.f32.mrf.mxu0
  %v1104 = vadd.f32 0.0, %v1103
  %1105 = vdwg.mxu0
  %v1107 = vsel %vm287, %v1018, 0
  %v1110 = vsel %vm287, %v1019, 0
  %1112 = vmatpush.msra.mxu0 0.0
  %1113 = vmatpush.msra.mxu0 0.0
  %1114 = vmatpush.msra.mxu0 0.0
  %1115 = vmatpush.msra.mxu0 0.0
  %1116 = vmatpush.msra.mxu0 0.0
  %1117 = vmatpush.msra.mxu0 0.0
  %1118 = vmatpush.msra.mxu0 0.0
  %1119 = vmatpush.msra.mxu0 0.0
  %1120 = vmatpush.msra.mxu0 0.0
  %1121 = vmatpush.msra.mxu0 0.0
  %1122 = vmatpush.msra.mxu0 0.0
  %1123 = vmatpush.msra.mxu0 0.0
  %1124 = vmatpush.msra.mxu0 0.0
  %1125 = vmatpush.msra.mxu0 0.0
  %1126 = vmatpush.msra.mxu0 %v1021
  %1127 = vmatpush.msra.mxu0 %v1020
  %1128 = vmatmul.f32.gmra.mxu0 %v1107
  %v1129 = vpop.f32.mrf.mxu0
  %v1130 = vadd.f32 %v1101, %v1129
  %1131 = vmatmul.f32.gmra.mxu0 %v1110
  %v1132 = vpop.f32.mrf.mxu0
  %v1133 = vadd.f32 %v1104, %v1132
  %1134 = vdwg.mxu0
  %v1135 = vmul.f32 %v890, %v429
  %v1136 = vmul.f32 %v893, %v429
  %v1138 = vsel %vm86, %v1135, 0
  %v1141 = vsel %vm86, %v1136, 0
  %1143 = vmatpush.xpose.msra.mxu0 0.0
  %1144 = vmatpush.xpose.msra.mxu0 0.0
  %1145 = vmatpush.xpose.msra.mxu0 0.0
  %1146 = vmatpush.xpose.msra.mxu0 0.0
  %1147 = vmatpush.xpose.msra.mxu0 0.0
  %1148 = vmatpush.xpose.msra.mxu0 0.0
  %1149 = vmatpush.xpose.msra.mxu0 0.0
  %1150 = vmatpush.xpose.msra.mxu0 0.0
  %1151 = vmatpush.xpose.msra.mxu0 0.0
  %1152 = vmatpush.xpose.msra.mxu0 0.0
  %1153 = vmatpush.xpose.msra.mxu0 0.0
  %1154 = vmatpush.xpose.msra.mxu0 0.0
  %1155 = vmatpush.xpose.msra.mxu0 0.0
  %1156 = vmatpush.xpose.msra.mxu0 0.0
  %1157 = vmatpush.xpose.msra.mxu0 %v973
  %1158 = vmatpush.xpose.msra.mxu0 %v970
  %1159 = vmatmul.f32.gmra.mxu0 %v1138
  %v1160 = vpop.f32.mrf.mxu0
  %v1161 = vadd.f32 %v76, %v1160
  %1162 = vmatmul.f32.gmra.mxu0 %v1141
  %v1163 = vpop.f32.mrf.mxu0
  %v1164 = vadd.f32 %v77, %v1163
  %1165 = vdwg.mxu0
  %v1166 = vsel %vm287, %v1161, -inf
  %1167 = vmax.xlane.f32.xlu0 %v1166
  %v1168 = vpop.xlane.xlu0 %1167
  %v1169 = vsel %vm287, %v1164, -inf
  %1170 = vmax.xlane.f32.xlu0 %v1169
  %v1171 = vpop.xlane.xlu0 %1170
  %v1172 = vsub.f32 %v1161, %v1168
  %v1173 = vsub.f32 %v1164, %v1171
  %v1174 = vmul.f32 %v1172, 1.442695
  %v1175 = vpow.pop %v1174
  %v1176 = vmul.f32 %v1173, 1.442695
  %v1177 = vpow.pop %v1176
  %v1178 = vsel %vm287, %v1175, 0.0
  %1179 = vadd.xlane.f32.xlu0 %v1178
  %v1180 = vpop.xlane.xlu0 %1179
  %v1181 = vsel %vm287, %v1177, 0.0
  %1182 = vadd.xlane.f32.xlu0 %v1181
  %v1183 = vpop.xlane.xlu0 %1182
  %v1184 = vrcp.pop %v1180
  %v1185 = vrcp.pop %v1183
  %v1186 = vmul.f32 %v1175, %v1184
  %v1187 = vmul.f32 %v1177, %v1185
  %v1188 = vmul.f32 %v956, %v429
  %v1189 = vmul.f32 %v959, %v429
  %v1191 = vsel %vm287, %v1186, 0
  %v1194 = vsel %vm287, %v1187, 0
  %1196 = vmatpush.msra.mxu0 0.0
  %1197 = vmatpush.msra.mxu0 0.0
  %1198 = vmatpush.msra.mxu0 0.0
  %1199 = vmatpush.msra.mxu0 0.0
  %1200 = vmatpush.msra.mxu0 0.0
  %1201 = vmatpush.msra.mxu0 0.0
  %1202 = vmatpush.msra.mxu0 0.0
  %1203 = vmatpush.msra.mxu0 0.0
  %1204 = vmatpush.msra.mxu0 0.0
  %1205 = vmatpush.msra.mxu0 0.0
  %1206 = vmatpush.msra.mxu0 0.0
  %1207 = vmatpush.msra.mxu0 0.0
  %1208 = vmatpush.msra.mxu0 0.0
  %1209 = vmatpush.msra.mxu0 0.0
  %1210 = vmatpush.msra.mxu0 %v1189
  %1211 = vmatpush.msra.mxu0 %v1188
  %1212 = vmatmul.f32.gmra.mxu0 %v1191
  %v1213 = vpop.f32.mrf.mxu0
  %v1214 = vadd.f32 0.0, %v1213
  %1215 = vmatmul.f32.gmra.mxu0 %v1194
  %v1216 = vpop.f32.mrf.mxu0
  %v1217 = vadd.f32 0.0, %v1216
  %1218 = vdwg.mxu0
  %v1219 = vadd.f32 %v1130, %v1214
  %v1220 = vadd.f32 %v1133, %v1217
  %v1221 = vmul.f32 %v890, %v518
  %v1222 = vmul.f32 %v893, %v518
  %v1224 = vsel %vm86, %v1221, 0
  %v1227 = vsel %vm86, %v1222, 0
  %1229 = vmatpush.xpose.msra.mxu0 0.0
  %1230 = vmatpush.xpose.msra.mxu0 0.0
  %1231 = vmatpush.xpose.msra.mxu0 0.0
  %1232 = vmatpush.xpose.msra.mxu0 0.0
  %1233 = vmatpush.xpose.msra.mxu0 0.0
  %1234 = vmatpush.xpose.msra.mxu0 0.0
  %1235 = vmatpush.xpose.msra.mxu0 0.0
  %1236 = vmatpush.xpose.msra.mxu0 0.0
  %1237 = vmatpush.xpose.msra.mxu0 0.0
  %1238 = vmatpush.xpose.msra.mxu0 0.0
  %1239 = vmatpush.xpose.msra.mxu0 0.0
  %1240 = vmatpush.xpose.msra.mxu0 0.0
  %1241 = vmatpush.xpose.msra.mxu0 0.0
  %1242 = vmatpush.xpose.msra.mxu0 0.0
  %1243 = vmatpush.xpose.msra.mxu0 %v973
  %1244 = vmatpush.xpose.msra.mxu0 %v970
  %1245 = vmatmul.f32.gmra.mxu0 %v1224
  %v1246 = vpop.f32.mrf.mxu0
  %v1247 = vadd.f32 %v76, %v1246
  %1248 = vmatmul.f32.gmra.mxu0 %v1227
  %v1249 = vpop.f32.mrf.mxu0
  %v1250 = vadd.f32 %v77, %v1249
  %1251 = vdwg.mxu0
  %v1252 = vsel %vm287, %v1247, -inf
  %1253 = vmax.xlane.f32.xlu0 %v1252
  %v1254 = vpop.xlane.xlu0 %1253
  %v1255 = vsel %vm287, %v1250, -inf
  %1256 = vmax.xlane.f32.xlu0 %v1255
  %v1257 = vpop.xlane.xlu0 %1256
  %v1258 = vsub.f32 %v1247, %v1254
  %v1259 = vsub.f32 %v1250, %v1257
  %v1260 = vmul.f32 %v1258, 1.442695
  %v1261 = vpow.pop %v1260
  %v1262 = vmul.f32 %v1259, 1.442695
  %v1263 = vpow.pop %v1262
  %v1264 = vsel %vm287, %v1261, 0.0
  %1265 = vadd.xlane.f32.xlu0 %v1264
  %v1266 = vpop.xlane.xlu0 %1265
  %v1267 = vsel %vm287, %v1263, 0.0
  %1268 = vadd.xlane.f32.xlu0 %v1267
  %v1269 = vpop.xlane.xlu0 %1268
  %v1270 = vrcp.pop %v1266
  %v1271 = vrcp.pop %v1269
  %v1272 = vmul.f32 %v1261, %v1270
  %v1273 = vmul.f32 %v1263, %v1271
  %v1274 = vmul.f32 %v956, %v518
  %v1275 = vmul.f32 %v959, %v518
  %v1277 = vsel %vm287, %v1272, 0
  %v1280 = vsel %vm287, %v1273, 0
  %1282 = vmatpush.msra.mxu0 0.0
  %1283 = vmatpush.msra.mxu0 0.0
  %1284 = vmatpush.msra.mxu0 0.0
  %1285 = vmatpush.msra.mxu0 0.0
  %1286 = vmatpush.msra.mxu0 0.0
  %1287 = vmatpush.msra.mxu0 0.0
  %1288 = vmatpush.msra.mxu0 0.0
  %1289 = vmatpush.msra.mxu0 0.0
  %1290 = vmatpush.msra.mxu0 0.0
  %1291 = vmatpush.msra.mxu0 0.0
  %1292 = vmatpush.msra.mxu0 0.0
  %1293 = vmatpush.msra.mxu0 0.0
  %1294 = vmatpush.msra.mxu0 0.0
  %1295 = vmatpush.msra.mxu0 0.0
  %1296 = vmatpush.msra.mxu0 %v1275
  %1297 = vmatpush.msra.mxu0 %v1274
  %1298 = vmatmul.f32.gmra.mxu0 %v1277
  %v1299 = vpop.f32.mrf.mxu0
  %v1300 = vadd.f32 0.0, %v1299
  %1301 = vmatmul.f32.gmra.mxu0 %v1280
  %v1302 = vpop.f32.mrf.mxu0
  %v1303 = vadd.f32 0.0, %v1302
  %1304 = vdwg.mxu0
  %v1305 = vadd.f32 %v1219, %v1300
  %v1306 = vadd.f32 %v1220, %v1303
  %s1307 = scalar_lea.vmem %s11, 32
  %v1308 = vld [vmem:[%s1307] sm:$0xff]
  %v1309 = vld [vmem:[%s1307 + $0x8] sm:$0xff]
  %v1310 = vld [vmem:[%s1307 + $0x10] sm:$0xff]
  %v1311 = vld [vmem:[%s1307 + $0x18] sm:$0xff]
  %s1312 = scalar_lea.vmem %s12, 1
  %v1313 = vld [vmem:[%s1312] sm:$0x1]
  %v1315 = vperm.slane %v1313, 0
  %v1318 = vsel %vm86, %v1305, 0
  %v1321 = vsel %vm86, %v1306, 0
  %1323 = vmatpush.msra.mxu0 0.0
  %1324 = vmatpush.msra.mxu0 0.0
  %1325 = vmatpush.msra.mxu0 0.0
  %1326 = vmatpush.msra.mxu0 0.0
  %1327 = vmatpush.msra.mxu0 0.0
  %1328 = vmatpush.msra.mxu0 0.0
  %1329 = vmatpush.msra.mxu0 0.0
  %1330 = vmatpush.msra.mxu0 0.0
  %1331 = vmatpush.msra.mxu0 0.0
  %1332 = vmatpush.msra.mxu0 0.0
  %1333 = vmatpush.msra.mxu0 0.0
  %1334 = vmatpush.msra.mxu0 0.0
  %1335 = vmatpush.msra.mxu0 %v1311
  %1336 = vmatpush.msra.mxu0 %v1310
  %1337 = vmatpush.msra.mxu0 %v1309
  %1338 = vmatpush.msra.mxu0 %v1308
  %1339 = vmatmul.f32.gmra.mxu0 %v1318
  %v1340 = vpop.f32.mrf.mxu0
  %v1341 = vadd.f32 %v1315, %v1340
  %1342 = vmatmul.f32.gmra.mxu0 %v1321
  %v1343 = vpop.f32.mrf.mxu0
  %v1344 = vadd.f32 %v1315, %v1343
  %1345 = vdwg.mxu0
  %v1346 = vadd.f32 %v1341, %v854
  %v1347 = vadd.f32 %v1344, %v855
  %s1348 = scalar_lea.vmem %s13, 1
  %v1349 = vld [vmem:[%s1348] sm:$0x1]
  %s1350 = scalar_lea.vmem %s14, 1
  %v1351 = vld [vmem:[%s1350] sm:$0x1]
  %v1352 = vsel %vm86, %v1346, 0.0
  %1353 = vadd.xlane.f32.xlu0 %v1352
  %v1354 = vpop.xlane.xlu0 %1353
  %v1355 = vsel %vm86, %v1347, 0.0
  %1356 = vadd.xlane.f32.xlu0 %v1355
  %v1357 = vpop.xlane.xlu0 %1356
  %v1358 = vmul.f32 %v1354, %v99
  %v1359 = vmul.f32 %v1357, %v99
  %v1360 = vsub.f32 %v1346, %v1358
  %v1361 = vsub.f32 %v1347, %v1359
  %v1362 = vmul.f32 %v1360, %v1360
  %v1363 = vmul.f32 %v1361, %v1361
  %v1364 = vsel %vm86, %v1362, 0.0
  %1365 = vadd.xlane.f32.xlu0 %v1364
  %v1366 = vpop.xlane.xlu0 %1365
  %v1367 = vsel %vm86, %v1363, 0.0
  %1368 = vadd.xlane.f32.xlu0 %v1367
  %v1369 = vpop.xlane.xlu0 %1368
  %v1370 = vmul.f32 %v1366, %v99
  %v1371 = vmul.f32 %v1369, %v99
  %v1372 = vadd.f32 %v1370, 1e-12
  %v1373 = vadd.f32 %v1371, 1e-12
  %v1374 = vrsqrt.pop %v1372
  %v1375 = vmul.f32 %v1374, %v1372
  %v1376 = vmul.f32 %v1375, %v1374
  %v1377 = vmul.f32 0.5, %v1376
  %v1378 = vsub.f32 1.5, %v1377
  %v1379 = vmul.f32 %v1374, %v1378
  %vm1380 = vweird.f32 %v1372
  %vm1381 = vweird.f32 %v1374
  %vm1382 = vmor %vm1380, %vm1381
  %v1383 = vsel %vm1382, %v1374, %v1379
  %v1384 = vrsqrt.pop %v1373
  %v1385 = vmul.f32 %v1384, %v1373
  %v1386 = vmul.f32 %v1385, %v1384
  %v1387 = vmul.f32 0.5, %v1386
  %v1388 = vsub.f32 1.5, %v1387
  %v1389 = vmul.f32 %v1384, %v1388
  %vm1390 = vweird.f32 %v1373
  %vm1391 = vweird.f32 %v1384
  %vm1392 = vmor %vm1390, %vm1391
  %v1393 = vsel %vm1392, %v1384, %v1389
  %v1394 = vmul.f32 %v1360, %v1383
  %v1395 = vmul.f32 %v1361, %v1393
  %v1397 = vperm.slane %v1349, 0
  %v1399 = vmul.f32 %v1394, %v1397
  %v1400 = vmul.f32 %v1395, %v1397
  %v1402 = vperm.slane %v1351, 0
  %v1404 = vadd.f32 %v1399, %v1402
  %v1405 = vadd.f32 %v1400, %v1402
  %s1406 = scalar_lea.vmem %s15, 32
  %v1407 = vld [vmem:[%s1406] sm:$0xff]
  %v1408 = vld [vmem:[%s1406 + $0x8] sm:$0xff]
  %v1409 = vld [vmem:[%s1406 + $0x10] sm:$0xff]
  %v1410 = vld [vmem:[%s1406 + $0x18] sm:$0xff]
  %s1411 = scalar_lea.vmem %s16, 1
  %v1412 = vld [vmem:[%s1411] sm:$0x1]
  %v1414 = vperm.slane %v1412, 0
  %v1417 = vsel %vm86, %v1404, 0
  %v1420 = vsel %vm86, %v1405, 0
  %1422 = vmatpush.msra.mxu0 0.0
  %1423 = vmatpush.msra.mxu0 0.0
  %1424 = vmatpush.msra.mxu0 0.0
  %1425 = vmatpush.msra.mxu0 0.0
  %1426 = vmatpush.msra.mxu0 0.0
  %1427 = vmatpush.msra.mxu0 0.0
  %1428 = vmatpush.msra.mxu0 0.0
  %1429 = vmatpush.msra.mxu0 0.0
  %1430 = vmatpush.msra.mxu0 0.0
  %1431 = vmatpush.msra.mxu0 0.0
  %1432 = vmatpush.msra.mxu0 0.0
  %1433 = vmatpush.msra.mxu0 0.0
  %1434 = vmatpush.msra.mxu0 %v1410
  %1435 = vmatpush.msra.mxu0 %v1409
  %1436 = vmatpush.msra.mxu0 %v1408
  %1437 = vmatpush.msra.mxu0 %v1407
  %1438 = vmatmul.f32.gmra.mxu0 %v1417
  %v1439 = vpop.f32.mrf.mxu0
  %v1440 = vadd.f32 %v1414, %v1439
  %1441 = vmatmul.f32.gmra.mxu0 %v1420
  %v1442 = vpop.f32.mrf.mxu0
  %v1443 = vadd.f32 %v1414, %v1442
  %1444 = vdwg.mxu0
  %v1445 = vmul.f32 %v1440, 0.5
  %v1446 = vmul.f32 %v1443, 0.5
  %v1447 = vmul.f32 %v1440, 0.044715
  %v1448 = vmul.f32 %v1443, 0.044715
  %v1449 = vmul.f32 %v1447, %v1440
  %v1450 = vmul.f32 %v1448, %v1443
  %v1451 = vmul.f32 %v1449, %v1440
  %v1452 = vmul.f32 %v1450, %v1443
  %v1453 = vadd.f32 %v1440, %v1451
  %v1454 = vadd.f32 %v1443, %v1452
  %v1455 = vmul.f32 %v1453, 0.7978846
  %v1456 = vmul.f32 %v1454, 0.7978846
  %v1457 = vtanh.pop %v1455
  %v1458 = vtanh.pop %v1456
  %v1459 = vadd.f32 %v1457, 1.0
  %v1460 = vadd.f32 %v1458, 1.0
  %v1461 = vmul.f32 %v1445, %v1459
  %v1462 = vmul.f32 %v1446, %v1460
  %s1463 = scalar_lea.vmem %s17, 64
  %v1464 = vld [vmem:[%s1463] sm:$0xff]
  %v1465 = vld [vmem:[%s1463 + $0x8] sm:$0xff]
  %v1466 = vld [vmem:[%s1463 + $0x10] sm:$0xff]
  %v1467 = vld [vmem:[%s1463 + $0x18] sm:$0xff]
  %v1468 = vld [vmem:[%s1463 + $0x20] sm:$0xff]
  %v1469 = vld [vmem:[%s1463 + $0x28] sm:$0xff]
  %v1470 = vld [vmem:[%s1463 + $0x30] sm:$0xff]
  %v1471 = vld [vmem:[%s1463 + $0x38] sm:$0xff]
  %s1472 = scalar_lea.vmem %s18, 1
  %v1473 = vld [vmem:[%s1472] sm:$0x1]
  %v1475 = vperm.slane %v1473, 0
  %v1478 = vsel %vm768, %v1461, 0
  %v1481 = vsel %vm768, %v1462, 0
  %1483 = vmatpush.msra.mxu0 0.0
  %1484 = vmatpush.msra.mxu0 0.0
  %1485 = vmatpush.msra.mxu0 0.0
  %1486 = vmatpush.msra.mxu0 0.0
  %1487 = vmatpush.msra.mxu0 0.0
  %1488 = vmatpush.msra.mxu0 0.0
  %1489 = vmatpush.msra.mxu0 0.0
  %1490 = vmatpush.msra.mxu0 0.0
  %1491 = vmatpush.msra.mxu0 %v1471
  %1492 = vmatpush.msra.mxu0 %v1470
  %1493 = vmatpush.msra.mxu0 %v1469
  %1494 = vmatpush.msra.mxu0 %v1468
  %1495 = vmatpush.msra.mxu0 %v1467
  %1496 = vmatpush.msra.mxu0 %v1466
  %1497 = vmatpush.msra.mxu0 %v1465
  %1498 = vmatpush.msra.mxu0 %v1464
  %1499 = vmatmul.f32.gmra.mxu0 %v1478
  %v1500 = vpop.f32.mrf.mxu0
  %v1501 = vadd.f32 %v1475, %v1500
  %1502 = vmatmul.f32.gmra.mxu0 %v1481
  %v1503 = vpop.f32.mrf.mxu0
  %v1504 = vadd.f32 %v1475, %v1503
  %1505 = vdwg.mxu0
  %v1506 = vadd.f32 %v1501, %v1404
  %v1507 = vadd.f32 %v1504, %v1405
  %s1508 = scalar_lea.vmem %s19, 1
  %v1509 = vld [vmem:[%s1508] sm:$0x1]
  %s1510 = scalar_lea.vmem %s20, 1
  %v1511 = vld [vmem:[%s1510] sm:$0x1]
  %v1512 = vsel %vm86, %v1506, 0.0
  %1513 = vadd.xlane.f32.xlu0 %v1512
  %v1514 = vpop.xlane.xlu0 %1513
  %v1515 = vsel %vm86, %v1507, 0.0
  %1516 = vadd.xlane.f32.xlu0 %v1515
  %v1517 = vpop.xlane.xlu0 %1516
  %v1518 = vmul.f32 %v1514, %v99
  %v1519 = vmul.f32 %v1517, %v99
  %v1520 = vsub.f32 %v1506, %v1518
  %v1521 = vsub.f32 %v1507, %v1519
  %v1522 = vmul.f32 %v1520, %v1520
  %v1523 = vmul.f32 %v1521, %v1521
  %v1524 = vsel %vm86, %v1522, 0.0
  %1525 = vadd.xlane.f32.xlu0 %v1524
  %v1526 = vpop.xlane.xlu0 %1525
  %v1527 = vsel %vm86, %v1523, 0.0
  %1528 = vadd.xlane.f32.xlu0 %v1527
  %v1529 = vpop.xlane.xlu0 %1528
  %v1530 = vmul.f32 %v1526, %v99
  %v1531 = vmul.f32 %v1529, %v99
  %v1532 = vadd.f32 %v1530, 1e-12
  %v1533 = vadd.f32 %v1531, 1e-12
  %v1534 = vrsqrt.pop %v1532
  %v1535 = vmul.f32 %v1534, %v1532
  %v1536 = vmul.f32 %v1535, %v1534
  %v1537 = vmul.f32 0.5, %v1536
  %v1538 = vsub.f32 1.5, %v1537
  %v1539 = vmul.f32 %v1534, %v1538
  %vm1540 = vweird.f32 %v1532
  %vm1541 = vweird.f32 %v1534
  %vm1542 = vmor %vm1540, %vm1541
  %v1543 = vsel %vm1542, %v1534, %v1539
  %v1544 = vrsqrt.pop %v1533
  %v1545 = vmul.f32 %v1544, %v1533
  %v1546 = vmul.f32 %v1545, %v1544
  %v1547 = vmul.f32 0.5, %v1546
  %v1548 = vsub.f32 1.5, %v1547
  %v1549 = vmul.f32 %v1544, %v1548
  %vm1550 = vweird.f32 %v1533
  %vm1551 = vweird.f32 %v1544
  %vm1552 = vmor %vm1550, %vm1551
  %v1553 = vsel %vm1552, %v1544, %v1549
  %v1554 = vmul.f32 %v1520, %v1543
  %v1555 = vmul.f32 %v1521, %v1553
  %v1557 = vperm.slane %v1509, 0
  %v1559 = vmul.f32 %v1554, %v1557
  %v1560 = vmul.f32 %v1555, %v1557
  %v1562 = vperm.slane %v1511, 0
  %v1564 = vadd.f32 %v1559, %v1562
  %v1565 = vadd.f32 %v1560, %v1562
  %v1566 = vld [vmem:[%s21] sm:$0x1]
  %v1568 = vperm.slane %v1566, 0
  %v1570 = vmul.f32 %v1564, %v1568
  %v1571 = vmul.f32 %v1565, %v1568
  %v1572 = vsel %vm86, %v1570, 0.0
  %1573 = vadd.xlane.f32.xlu0 %v1572
  %v1574 = vpop.xlane.xlu0 %1573
  %v1575 = vsel %vm86, %v1571, 0.0
  %1576 = vadd.xlane.f32.xlu0 %v1575
  %v1577 = vpop.xlane.xlu0 %1576
  %v1578 = vld [vmem:[#allocation2] sm:$0x1]
  %v1580 = vperm.slane %v1578, 0
  %v1582 = vadd.f32 %v1574, %v1580
  %v1583 = vadd.f32 %v1577, %v1580
  %vm1584 = vcmask 7168
  %1585 = vst.msk [vmem:[%s23] sm:$0xff] %vm1584, %v1582
  %1586 = vst.msk [vmem:[%s23 + $0x8] sm:$0xff] %vm1584, %v1583
  // Predicated region
  $region94: #{rhythmic_forward.1} parent=0 // pred_check
    _
  $region95: #{rhythmic_forward.1} parent=0 // pred_check_branch
    %1588 = sbr.rel (0) target = $region97
  $region96: #{rhythmic_forward.1} parent=0 // pred_region
    _
  $region97: #{rhythmic_forward.1} parent=0 // pred_fallthru
    _
  // Predicated region
  $region98: #{rhythmic_forward.1} parent=0 // pred_check
    _
  $region99: #{rhythmic_forward.1} parent=0 // pred_check_branch
    %1590 = sbr.rel (0) target = $region101
  $region100: #{rhythmic_forward.1} parent=0 // pred_region
    _
  $region101: #{rhythmic_forward.1} parent=0 // pred_fallthru
    _

</llo_original>
